<compile_context>
chip_gen: v6e
topology: v6e:2x2x1
jax: 0.10.0
libtpu: 0.0.40
codegen_flags: <defaults>
</compile_context>

<pallas_src>
import functools

import numpy as np

import jax
import jax.numpy as jnp
from jax import lax
from jax.experimental import pallas as pl
from jax.experimental.pallas import tpu as pltpu


def _silu(x):
    return x / (1.0 + jnp.exp(-x))


def _group_norm(h, mg, bg, gamma, beta, eps):
    """Two-pass GroupNorm on h (C, HW).

    mg: (G, C) averages channels into groups (entries 1/(Cg*HW), zero for
        padded channels);  bg: (C, G) broadcasts group stats back to channels
        (zero rows for padded channels).
    """
    s1 = jnp.sum(h, axis=1, keepdims=True)                                # (C, 1)
    mean = jnp.dot(bg, jnp.dot(mg, s1, preferred_element_type=jnp.float32),
                   preferred_element_type=jnp.float32)                    # (C, 1)
    d = h - mean
    s2 = jnp.sum(d * d, axis=1, keepdims=True)                            # (C, 1)
    var = jnp.dot(bg, jnp.dot(mg, s2, preferred_element_type=jnp.float32),
                  preferred_element_type=jnp.float32)
    return d * lax.rsqrt(var + eps) * gamma + beta


def _conv3x3(h, w_ref, bias, masks, W):
    """3x3 SAME conv of h (C, HW) with w_ref (3, Cp, 3*C) bf16 (one slab / dy).

    Taps are built in value-land: lane rolls of the flattened image plus
    precomputed boundary masks (1 = keep); the conv is 3 accumulating bf16
    MXU matmuls with f32 accumulation.
    """
    not_l, not_r, not_t, not_b = masks
    HW = h.shape[-1]
    left = pltpu.roll(h, 1, axis=1) * not_l           # pixel (y, x-1), dx = 0
    right = pltpu.roll(h, HW - 1, axis=1) * not_r     # pixel (y, x+1), dx = 2
    patch0 = jnp.concatenate([left, h, right], axis=0)   # (3C, HW), dx = 0,1,2

    acc = bias                                         # (Cp, 1) broadcasts
    for dy, oy, my in ((0, -1, not_t), (1, 0, None), (2, 1, not_b)):
        if oy == 0:
            p = patch0
        else:
            p = pltpu.roll(patch0, (-oy * W) % HW, axis=1) * my
        acc = acc + jnp.dot(w_ref[dy], p.astype(jnp.bfloat16),
                            preferred_element_type=jnp.float32)
    return acc


def _block_kernel(W, eps,
                  x_ref, temb_ref,
                  mask_ref,
                  w1_ref, b1_ref, g1_ref, be1_ref,
                  w2_ref, b2_ref, g2_ref, be2_ref,
                  wr_ref, br_ref,
                  wts_ref, bts_ref, wtb_ref, btb_ref,
                  mg_ref, bg_ref,
                  out_ref):
    x = x_ref[0]                                        # (Cin, HW) f32
    m = mask_ref[...]                                   # (4, HW) {0,1} f32
    masks = (m[0:1, :], m[1:2, :], m[2:3, :], m[3:4, :])
    mg = mg_ref[...]
    bg = bg_ref[...]

    # ---- conv1 + GroupNorm1 ----
    h = _conv3x3(x, w1_ref, b1_ref[...], masks, W)      # (Cp, HW) f32
    h = _group_norm(h, mg, bg, g1_ref[...], be1_ref[...], eps)

    # ---- time MLP (SiLU -> Linear), FiLM: h * (1 + scale) + shift ----
    t = _silu(temb_ref[0])                              # (Tdim, 1) f32
    scale = jnp.dot(wts_ref[...], t,
                    preferred_element_type=jnp.float32) + bts_ref[...]
    shift = jnp.dot(wtb_ref[...], t,
                    preferred_element_type=jnp.float32) + btb_ref[...]
    h = h * (1.0 + scale) + shift

    # ---- conv2 + GroupNorm2 + SiLU ----
    h = _conv3x3(h, w2_ref, b2_ref[...], masks, W)
    h = _silu(_group_norm(h, mg, bg, g2_ref[...], be2_ref[...], eps))

    # ---- residual 1x1 conv ----
    res = jnp.dot(wr_ref[...], x.astype(jnp.bfloat16),
                  preferred_element_type=jnp.float32) + br_ref[...]

    out = h + res                                       # (Cp, HW) f32
    cout = out_ref.shape[1]
    out_ref[0] = out[0:cout, :].astype(out_ref.dtype)   # store only real channels


def _round_up(n, m):
    return ((n + m - 1) // m) * m


def time_embedded_conv_block(x_nchw, t_emb, params, num_groups=8, eps=1e-5):
    """x_nchw: (B, Cin, H, W), t_emb: (B, Tdim). Returns (B, Cout, H, W)."""
    B, Cin, H, W = x_nchw.shape
    Cout = params["w1"].shape[-1]
    Tdim = t_emb.shape[-1]
    assert Cout % num_groups == 0, "GroupNorm requires Cout % num_groups == 0"
    Cg = Cout // num_groups
    HW = H * W
    Cp = _round_up(Cout, 8)          # channels are the SUBLANE axis -> pad to 8
    f32, bf16 = jnp.float32, jnp.bfloat16

    def cvec(a):                     # (1, Cout) -> (Cp, 1) f32, zero-padded
        return jnp.pad(a.reshape(Cout, 1).astype(f32), ((0, Cp - Cout), (0, 0)))

    def convwt(w, ci_pad):
        # HWIO (3, 3, ci, co) -> (3, Cp, 3*ci_pad) bf16; column = dx*ci_pad + ci
        kh, kw, ci, co = w.shape
        w = jnp.pad(w.astype(f32),
                    ((0, 0), (0, 0), (0, ci_pad - ci), (0, Cp - co)))
        w = jnp.transpose(w, (3, 0, 1, 2)).reshape(Cp, kh, kw * ci_pad)
        return jnp.transpose(w, (1, 0, 2)).astype(bf16)

    w1t = convwt(params["w1"], Cin)                      # (3, Cp, 3*Cin)
    w2t = convwt(params["w2"], Cp)                       # (3, Cp, 3*Cp)
    wrt = jnp.pad(params["wr"].astype(f32).T,
                  ((0, Cp - Cout), (0, 0))).astype(bf16)  # (Cp, Cin)

    b1, g1, be1 = cvec(params["b1"]), cvec(params["g1"]), cvec(params["be1"])
    b2, g2, be2 = cvec(params["b2"]), cvec(params["g2"]), cvec(params["be2"])
    br = cvec(params["br"])

    # time-MLP weight split into scale / shift halves, transposed to (Cp, Tdim)
    wt = params["wt"].astype(f32)
    bt = params["bt"].astype(f32)
    wts = jnp.pad(wt[:, :Cout].T, ((0, Cp - Cout), (0, 0)))
    wtb = jnp.pad(wt[:, Cout:].T, ((0, Cp - Cout), (0, 0)))
    bts, btb = cvec(bt[:, :Cout]), cvec(bt[:, Cout:])

    # factored group-combine matrices (instead of a dense (Cp, Cp) gmat)
    ch = np.arange(Cp)
    member = ((ch[None, :] // Cg == np.arange(num_groups)[:, None])
              & (ch[None, :] < Cout))
    mg = jnp.asarray(member.astype(np.float32) / (Cg * HW))       # (G, Cp)
    bg = jnp.asarray(member.T.astype(np.float32))                 # (Cp, G)

    # flattened-pixel boundary masks (1 = keep): [x!=0, x!=W-1, y!=0, y!=H-1]
    xs = np.arange(HW) % W
    ys = np.arange(HW) // W
    masks = jnp.asarray(np.stack([(xs != 0), (xs != W - 1),
                                  (ys != 0), (ys != H - 1)]).astype(np.float32))

    consts = (masks, w1t, b1, g1, be1, w2t, b2, g2, be2, wrt, br,
              wts, bts, wtb, btb, mg, bg)

    # Rough upper bound on live VMEM: f32 activation planes + one f32 and one
    # bf16 (3*Cp)-deep patch, double-buffered IO blocks + constants; clamp to
    # the chip's physical VMEM (defaults of 16/32 MiB can be too tight).
    const_bytes = sum(int(a.size) * a.dtype.itemsize for a in consts)
    act_bytes = (6 * 4 * HW * Cp            # h / diff / acc / temporaries (f32)
                 + 3 * HW * Cp * (4 + 4 + 2)  # patch0 + rolled patch + bf16 copy
                 + 8 * HW * (Cin + Cout))   # double-buffered in/out blocks
    est = act_bytes + 2 * const_bytes
    try:
        cap = int(pltpu.get_tpu_info().vmem_capacity_bytes)
    except Exception:
        cap = 64 * 1024 * 1024
    vmem_limit = int(min(max(est + (8 << 20), 32 << 20), int(cap * 0.85)))

    def whole(a):
        nd = a.ndim
        return pl.BlockSpec(a.shape, lambda b, _nd=nd: (0,) * _nd)

    kernel = functools.partial(_block_kernel, W, eps)
    out = pl.pallas_call(
        kernel,
        out_shape=jax.ShapeDtypeStruct((B, Cout, HW), jnp.float32),
        grid_spec=pltpu.PrefetchScalarGridSpec(
            num_scalar_prefetch=0,
            grid=(B,),
            in_specs=[
                pl.BlockSpec((1, Cin, HW), lambda b: (b, 0, 0)),   # x, native NCHW
                pl.BlockSpec((1, Tdim, 1), lambda b: (b, 0, 0)),   # t_emb
            ] + [whole(a) for a in consts],
            out_specs=pl.BlockSpec((1, Cout, HW), lambda b: (b, 0, 0)),
        ),
        compiler_params=pltpu.CompilerParams(
            dimension_semantics=("parallel",),
            vmem_limit_bytes=vmem_limit,
        ),
    )(x_nchw.reshape(B, Cin, HW).astype(jnp.float32),
      t_emb.reshape(B, Tdim, 1).astype(jnp.float32),
      *consts)

    return out.reshape(B, Cout, H, W)       # free reshape; no slice / transpose


def ref_forward(x_nchw, t_emb, params, num_groups=8, eps=1e-5):
    """Pure-JAX reference matching the PyTorch module semantics."""
    x = jnp.transpose(x_nchw, (0, 2, 3, 1))
    Cout = params["w1"].shape[-1]

    def conv(z, w, b):
        y = lax.conv_general_dilated(z, w, (1, 1), "SAME",
                                     dimension_numbers=("NHWC", "HWIO", "NHWC"))
        return y + b.reshape(1, 1, 1, -1)

    def gn(z, gamma, beta):
        B, H, W, C = z.shape
        Cg = C // num_groups
        zg = z.reshape(B, H, W, num_groups, Cg)
        m = zg.mean(axis=(1, 2, 4), keepdims=True)
        v = ((zg - m) ** 2).mean(axis=(1, 2, 4), keepdims=True)
        zn = ((zg - m) / jnp.sqrt(v + eps)).reshape(B, H, W, C)
        return zn * gamma.reshape(1, 1, 1, -1) + beta.reshape(1, 1, 1, -1)

    silu = lambda z: z * jax.nn.sigmoid(z)

    h = gn(conv(x, params["w1"], params["b1"]), params["g1"], params["be1"])
    tp = silu(t_emb) @ params["wt"] + params["bt"]
    scale = tp[:, :Cout][:, None, None, :]
    shift = tp[:, Cout:][:, None, None, :]
    h = h * (1.0 + scale) + shift
    h = silu(gn(conv(h, params["w2"], params["b2"]), params["g2"], params["be2"]))
    res = x @ params["wr"] + params["br"].reshape(1, 1, 1, -1)     # 1x1 conv
    return jnp.transpose(h + res, (0, 3, 1, 2))


if __name__ == "__main__":
    B, Cin, Cout, H, W, Tdim, G = 2, 4, 8, 16, 16, 32, 8
    key = jax.random.PRNGKey(0)
    ks = jax.random.split(key, 16)

    def rnd(k, shape, s=0.1):
        return jax.random.normal(k, shape, jnp.float32) * s

    params = dict(
        wt=rnd(ks[0], (Tdim, 2 * Cout)), bt=rnd(ks[1], (1, 2 * Cout)),
        w1=rnd(ks[2], (3, 3, Cin, Cout)), b1=rnd(ks[3], (1, Cout)),
        g1=1.0 + rnd(ks[4], (1, Cout)), be1=rnd(ks[5], (1, Cout)),
        w2=rnd(ks[6], (3, 3, Cout, Cout)), b2=rnd(ks[7], (1, Cout)),
        g2=1.0 + rnd(ks[8], (1, Cout)), be2=rnd(ks[9], (1, Cout)),
        wr=rnd(ks[10], (Cin, Cout)), br=rnd(ks[11], (1, Cout)),
    )
    x = jax.random.normal(ks[12], (B, Cin, H, W), jnp.float32)     # NCHW like PyTorch
    t_emb = jax.random.normal(ks[13], (B, Tdim), jnp.float32)

    out = jax.block_until_ready(
        time_embedded_conv_block(x, t_emb, params, num_groups=G))
    ref = ref_forward(x, t_emb, params, num_groups=G)

    assert out.shape == (B, Cout, H, W), out.shape
    # bf16 weight/patch staging (with f32 accumulation and f32 GN/FiLM math)
    # => compare against the f32 reference at a correspondingly loose tolerance.
    if not jnp.allclose(out, ref, atol=5e-2, rtol=5e-2):
        max_err = float(jnp.max(jnp.abs(out - ref)))
        raise AssertionError(f"Pallas output mismatch, max abs err={max_err}")
    print("KERNEL_OK")
</pallas_src>

<mosaic_0001>
module attributes {stable_mosaic.version = 11 : i64} {
  func.func @_block_kernel(%arg0: i32, %arg1: memref<1x4x256xf32, #tpu.memory_space<vmem>>, %arg2: memref<1x32x1xf32, #tpu.memory_space<vmem>>, %arg3: memref<4x256xf32, #tpu.memory_space<vmem>>, %arg4: memref<3x8x12xbf16, #tpu.memory_space<vmem>>, %arg5: memref<8x1xf32, #tpu.memory_space<vmem>>, %arg6: memref<8x1xf32, #tpu.memory_space<vmem>>, %arg7: memref<8x1xf32, #tpu.memory_space<vmem>>, %arg8: memref<3x8x24xbf16, #tpu.memory_space<vmem>>, %arg9: memref<8x1xf32, #tpu.memory_space<vmem>>, %arg10: memref<8x1xf32, #tpu.memory_space<vmem>>, %arg11: memref<8x1xf32, #tpu.memory_space<vmem>>, %arg12: memref<8x4xbf16, #tpu.memory_space<vmem>>, %arg13: memref<8x1xf32, #tpu.memory_space<vmem>>, %arg14: memref<8x32xf32, #tpu.memory_space<vmem>>, %arg15: memref<8x1xf32, #tpu.memory_space<vmem>>, %arg16: memref<8x32xf32, #tpu.memory_space<vmem>>, %arg17: memref<8x1xf32, #tpu.memory_space<vmem>>, %arg18: memref<8x8xf32, #tpu.memory_space<vmem>>, %arg19: memref<8x8xf32, #tpu.memory_space<vmem>>, %arg20: memref<1x8x256xf32, #tpu.memory_space<vmem>>) attributes {dimension_semantics = [#tpu.dimension_semantics<parallel>], iteration_bounds = array<i64: 2>, scalar_prefetch = 0 : i64, scratch_operands = 0 : i64, tpu.core_type = #tpu.core_type<tc>, window_params = [{transform_indices = @transform_0, window_bounds = array<i64: 1, 4, 256>}, {transform_indices = @transform_1, window_bounds = array<i64: 1, 32, 1>}, {pipeline_mode = #tpu.pipeline_mode<synchronous>, transform_indices = @transform_2, window_bounds = array<i64: 4, 256>}, {pipeline_mode = #tpu.pipeline_mode<synchronous>, transform_indices = @transform_3, window_bounds = array<i64: 3, 8, 12>}, {pipeline_mode = #tpu.pipeline_mode<synchronous>, transform_indices = @transform_4, window_bounds = array<i64: 8, 1>}, {pipeline_mode = #tpu.pipeline_mode<synchronous>, transform_indices = @transform_5, window_bounds = array<i64: 8, 1>}, {pipeline_mode = #tpu.pipeline_mode<synchronous>, transform_indices = @transform_6, window_bounds = array<i64: 8, 1>}, {pipeline_mode = #tpu.pipeline_mode<synchronous>, transform_indices = @transform_7, window_bounds = array<i64: 3, 8, 24>}, {pipeline_mode = #tpu.pipeline_mode<synchronous>, transform_indices = @transform_8, window_bounds = array<i64: 8, 1>}, {pipeline_mode = #tpu.pipeline_mode<synchronous>, transform_indices = @transform_9, window_bounds = array<i64: 8, 1>}, {pipeline_mode = #tpu.pipeline_mode<synchronous>, transform_indices = @transform_10, window_bounds = array<i64: 8, 1>}, {pipeline_mode = #tpu.pipeline_mode<synchronous>, transform_indices = @transform_11, window_bounds = array<i64: 8, 4>}, {pipeline_mode = #tpu.pipeline_mode<synchronous>, transform_indices = @transform_12, window_bounds = array<i64: 8, 1>}, {pipeline_mode = #tpu.pipeline_mode<synchronous>, transform_indices = @transform_13, window_bounds = array<i64: 8, 32>}, {pipeline_mode = #tpu.pipeline_mode<synchronous>, transform_indices = @transform_14, window_bounds = array<i64: 8, 1>}, {pipeline_mode = #tpu.pipeline_mode<synchronous>, transform_indices = @transform_15, window_bounds = array<i64: 8, 32>}, {pipeline_mode = #tpu.pipeline_mode<synchronous>, transform_indices = @transform_16, window_bounds = array<i64: 8, 1>}, {pipeline_mode = #tpu.pipeline_mode<synchronous>, transform_indices = @transform_17, window_bounds = array<i64: 8, 8>}, {pipeline_mode = #tpu.pipeline_mode<synchronous>, transform_indices = @transform_18, window_bounds = array<i64: 8, 8>}, {transform_indices = @transform_19, window_bounds = array<i64: 1, 8, 256>}]} {
    %c0 = arith.constant 0 : index
    %c0_0 = arith.constant 0 : index
    %c0_1 = arith.constant 0 : index
    %0 = vector.load %arg1[%c0, %c0_0, %c0_1] : memref<1x4x256xf32, #tpu.memory_space<vmem>>, vector<1x4x256xf32>
    %1 = vector.shape_cast %0 : vector<1x4x256xf32> to vector<4x256xf32>
    %c0_2 = arith.constant 0 : index
    %c0_3 = arith.constant 0 : index
    %2 = vector.load %arg3[%c0_2, %c0_3] : memref<4x256xf32, #tpu.memory_space<vmem>>, vector<4x256xf32>
    %3 = vector.extract_strided_slice %2 {offsets = [0, 0], sizes = [1, 256], strides = [1, 1]} : vector<4x256xf32> to vector<1x256xf32>
    %4 = vector.extract_strided_slice %2 {offsets = [1, 0], sizes = [1, 256], strides = [1, 1]} : vector<4x256xf32> to vector<1x256xf32>
    %5 = vector.extract_strided_slice %2 {offsets = [2, 0], sizes = [1, 256], strides = [1, 1]} : vector<4x256xf32> to vector<1x256xf32>
    %6 = vector.extract_strided_slice %2 {offsets = [3, 0], sizes = [1, 256], strides = [1, 1]} : vector<4x256xf32> to vector<1x256xf32>
    %c0_4 = arith.constant 0 : index
    %c0_5 = arith.constant 0 : index
    %7 = vector.load %arg18[%c0_4, %c0_5] : memref<8x8xf32, #tpu.memory_space<vmem>>, vector<8x8xf32>
    %c0_6 = arith.constant 0 : index
    %c0_7 = arith.constant 0 : index
    %8 = vector.load %arg19[%c0_6, %c0_7] : memref<8x8xf32, #tpu.memory_space<vmem>>, vector<8x8xf32>
    %c0_8 = arith.constant 0 : index
    %c0_9 = arith.constant 0 : index
    %9 = vector.load %arg5[%c0_8, %c0_9] : memref<8x1xf32, #tpu.memory_space<vmem>>, vector<8x1xf32>
    %c1_i32 = arith.constant 1 : i32
    %10 = tpu.dynamic_rotate %1 by %c1_i32 dim 1 : vector<4x256xf32>, i32 -> vector<4x256xf32>
    %11 = vector.broadcast %3 : vector<1x256xf32> to vector<4x256xf32>
    %12 = arith.mulf %10, %11 : vector<4x256xf32>
    %c255_i32 = arith.constant 255 : i32
    %13 = tpu.dynamic_rotate %1 by %c255_i32 dim 1 : vector<4x256xf32>, i32 -> vector<4x256xf32>
    %14 = vector.broadcast %4 : vector<1x256xf32> to vector<4x256xf32>
    %15 = arith.mulf %13, %14 : vector<4x256xf32>
    %16 = tpu.concatenate %12, %1, %15 in 0 : vector<4x256xf32>, vector<4x256xf32>, vector<4x256xf32> -> vector<12x256xf32>
    %c16_i32 = arith.constant 16 : i32
    %17 = tpu.dynamic_rotate %16 by %c16_i32 dim 1 : vector<12x256xf32>, i32 -> vector<12x256xf32>
    %18 = vector.broadcast %5 : vector<1x256xf32> to vector<12x256xf32>
    %19 = arith.mulf %17, %18 : vector<12x256xf32>
    %c0_10 = arith.constant 0 : index
    %c0_11 = arith.constant 0 : index
    %c0_12 = arith.constant 0 : index
    %20 = vector.load %arg4[%c0_10, %c0_11, %c0_12] : memref<3x8x12xbf16, #tpu.memory_space<vmem>>, vector<1x8x12xbf16>
    %21 = vector.shape_cast %20 : vector<1x8x12xbf16> to vector<8x12xbf16>
    %22 = arith.truncf %19 : vector<12x256xf32> to vector<12x256xbf16>
    %cst = arith.constant dense<0.000000e+00> : vector<8x256xf32>
    %23 = tpu.matmul %21, %22, %cst {dimension_numbers = #tpu.dot_dimension_numbers<[1], [0], [0], [1], [0, 0, 1, 1], [], []>} : vector<8x12xbf16>, vector<12x256xbf16>, vector<8x256xf32> -> vector<8x256xf32>
    %24 = vector.broadcast %9 : vector<8x1xf32> to vector<8x256xf32>
    %25 = arith.addf %24, %23 : vector<8x256xf32>
    %c1 = arith.constant 1 : index
    %c0_13 = arith.constant 0 : index
    %c0_14 = arith.constant 0 : index
    %26 = vector.load %arg4[%c1, %c0_13, %c0_14] : memref<3x8x12xbf16, #tpu.memory_space<vmem>>, vector<1x8x12xbf16>
    %27 = vector.shape_cast %26 : vector<1x8x12xbf16> to vector<8x12xbf16>
    %28 = arith.truncf %16 : vector<12x256xf32> to vector<12x256xbf16>
    %cst_15 = arith.constant dense<0.000000e+00> : vector<8x256xf32>
    %29 = tpu.matmul %27, %28, %cst_15 {dimension_numbers = #tpu.dot_dimension_numbers<[1], [0], [0], [1], [0, 0, 1, 1], [], []>} : vector<8x12xbf16>, vector<12x256xbf16>, vector<8x256xf32> -> vector<8x256xf32>
    %30 = arith.addf %25, %29 : vector<8x256xf32>
    %c240_i32 = arith.constant 240 : i32
    %31 = tpu.dynamic_rotate %16 by %c240_i32 dim 1 : vector<12x256xf32>, i32 -> vector<12x256xf32>
    %32 = vector.broadcast %6 : vector<1x256xf32> to vector<12x256xf32>
    %33 = arith.mulf %31, %32 : vector<12x256xf32>
    %c2 = arith.constant 2 : index
    %c0_16 = arith.constant 0 : index
    %c0_17 = arith.constant 0 : index
    %34 = vector.load %arg4[%c2, %c0_16, %c0_17] : memref<3x8x12xbf16, #tpu.memory_space<vmem>>, vector<1x8x12xbf16>
    %35 = vector.shape_cast %34 : vector<1x8x12xbf16> to vector<8x12xbf16>
    %36 = arith.truncf %33 : vector<12x256xf32> to vector<12x256xbf16>
    %cst_18 = arith.constant dense<0.000000e+00> : vector<8x256xf32>
    %37 = tpu.matmul %35, %36, %cst_18 {dimension_numbers = #tpu.dot_dimension_numbers<[1], [0], [0], [1], [0, 0, 1, 1], [], []>} : vector<8x12xbf16>, vector<12x256xbf16>, vector<8x256xf32> -> vector<8x256xf32>
    %38 = arith.addf %30, %37 : vector<8x256xf32>
    %c0_19 = arith.constant 0 : index
    %c0_20 = arith.constant 0 : index
    %39 = vector.load %arg6[%c0_19, %c0_20] : memref<8x1xf32, #tpu.memory_space<vmem>>, vector<8x1xf32>
    %c0_21 = arith.constant 0 : index
    %c0_22 = arith.constant 0 : index
    %40 = vector.load %arg7[%c0_21, %c0_22] : memref<8x1xf32, #tpu.memory_space<vmem>>, vector<8x1xf32>
    %cst_23 = arith.constant dense<0.000000e+00> : vector<8xf32>
    %41 = vector.multi_reduction <add>, %38, %cst_23 [1] : vector<8x256xf32> to vector<8xf32>
    %42 = vector.shape_cast %41 : vector<8xf32> to vector<8x1xf32>
    %cst_24 = arith.constant dense<0.000000e+00> : vector<8x1xf32>
    %43 = tpu.matmul %7, %42, %cst_24 {dimension_numbers = #tpu.dot_dimension_numbers<[1], [0], [0], [1], [0, 0, 1, 1], [], []>} : vector<8x8xf32>, vector<8x1xf32>, vector<8x1xf32> -> vector<8x1xf32>
    %cst_25 = arith.constant dense<0.000000e+00> : vector<8x1xf32>
    %44 = tpu.matmul %8, %43, %cst_25 {dimension_numbers = #tpu.dot_dimension_numbers<[1], [0], [0], [1], [0, 0, 1, 1], [], []>} : vector<8x8xf32>, vector<8x1xf32>, vector<8x1xf32> -> vector<8x1xf32>
    %45 = vector.broadcast %44 : vector<8x1xf32> to vector<8x256xf32>
    %46 = arith.subf %38, %45 : vector<8x256xf32>
    %47 = arith.mulf %46, %46 : vector<8x256xf32>
    %cst_26 = arith.constant dense<0.000000e+00> : vector<8xf32>
    %48 = vector.multi_reduction <add>, %47, %cst_26 [1] : vector<8x256xf32> to vector<8xf32>
    %49 = vector.shape_cast %48 : vector<8xf32> to vector<8x1xf32>
    %cst_27 = arith.constant dense<0.000000e+00> : vector<8x1xf32>
    %50 = tpu.matmul %7, %49, %cst_27 {dimension_numbers = #tpu.dot_dimension_numbers<[1], [0], [0], [1], [0, 0, 1, 1], [], []>} : vector<8x8xf32>, vector<8x1xf32>, vector<8x1xf32> -> vector<8x1xf32>
    %cst_28 = arith.constant dense<0.000000e+00> : vector<8x1xf32>
    %51 = tpu.matmul %8, %50, %cst_28 {dimension_numbers = #tpu.dot_dimension_numbers<[1], [0], [0], [1], [0, 0, 1, 1], [], []>} : vector<8x8xf32>, vector<8x1xf32>, vector<8x1xf32> -> vector<8x1xf32>
    %cst_29 = arith.constant 9.99999974E-6 : f32
    %52 = vector.broadcast %cst_29 : f32 to vector<8x1xf32>
    %53 = arith.addf %51, %52 : vector<8x1xf32>
    %54 = math.rsqrt %53 : vector<8x1xf32>
    %55 = vector.broadcast %54 : vector<8x1xf32> to vector<8x256xf32>
    %56 = arith.mulf %46, %55 : vector<8x256xf32>
    %57 = vector.broadcast %39 : vector<8x1xf32> to vector<8x256xf32>
    %58 = arith.mulf %56, %57 : vector<8x256xf32>
    %59 = vector.broadcast %40 : vector<8x1xf32> to vector<8x256xf32>
    %60 = arith.addf %58, %59 : vector<8x256xf32>
    %c0_30 = arith.constant 0 : index
    %c0_31 = arith.constant 0 : index
    %c0_32 = arith.constant 0 : index
    %61 = vector.load %arg2[%c0_30, %c0_31, %c0_32] : memref<1x32x1xf32, #tpu.memory_space<vmem>>, vector<1x32x1xf32>
    %62 = vector.shape_cast %61 : vector<1x32x1xf32> to vector<32x1xf32>
    %cst_33 = arith.constant 0.000000e+00 : f32
    %63 = vector.broadcast %cst_33 : f32 to vector<32x1xf32>
    %64 = arith.subf %63, %62 : vector<32x1xf32>
    %65 = math.exp %64 : vector<32x1xf32>
    %cst_34 = arith.constant 1.000000e+00 : f32
    %66 = vector.broadcast %cst_34 : f32 to vector<32x1xf32>
    %67 = arith.addf %66, %65 : vector<32x1xf32>
    %68 = arith.divf %62, %67 : vector<32x1xf32>
    %c0_35 = arith.constant 0 : index
    %c0_36 = arith.constant 0 : index
    %69 = vector.load %arg14[%c0_35, %c0_36] : memref<8x32xf32, #tpu.memory_space<vmem>>, vector<8x32xf32>
    %cst_37 = arith.constant dense<0.000000e+00> : vector<8x1xf32>
    %70 = tpu.matmul %69, %68, %cst_37 {dimension_numbers = #tpu.dot_dimension_numbers<[1], [0], [0], [1], [0, 0, 1, 1], [], []>} : vector<8x32xf32>, vector<32x1xf32>, vector<8x1xf32> -> vector<8x1xf32>
    %c0_38 = arith.constant 0 : index
    %c0_39 = arith.constant 0 : index
    %71 = vector.load %arg15[%c0_38, %c0_39] : memref<8x1xf32, #tpu.memory_space<vmem>>, vector<8x1xf32>
    %72 = arith.addf %70, %71 : vector<8x1xf32>
    %c0_40 = arith.constant 0 : index
    %c0_41 = arith.constant 0 : index
    %73 = vector.load %arg16[%c0_40, %c0_41] : memref<8x32xf32, #tpu.memory_space<vmem>>, vector<8x32xf32>
    %cst_42 = arith.constant dense<0.000000e+00> : vector<8x1xf32>
    %74 = tpu.matmul %73, %68, %cst_42 {dimension_numbers = #tpu.dot_dimension_numbers<[1], [0], [0], [1], [0, 0, 1, 1], [], []>} : vector<8x32xf32>, vector<32x1xf32>, vector<8x1xf32> -> vector<8x1xf32>
    %c0_43 = arith.constant 0 : index
    %c0_44 = arith.constant 0 : index
    %75 = vector.load %arg17[%c0_43, %c0_44] : memref<8x1xf32, #tpu.memory_space<vmem>>, vector<8x1xf32>
    %76 = arith.addf %74, %75 : vector<8x1xf32>
    %cst_45 = arith.constant 1.000000e+00 : f32
    %77 = vector.broadcast %cst_45 : f32 to vector<8x1xf32>
    %78 = arith.addf %77, %72 : vector<8x1xf32>
    %79 = vector.broadcast %78 : vector<8x1xf32> to vector<8x256xf32>
    %80 = arith.mulf %60, %79 : vector<8x256xf32>
    %81 = vector.broadcast %76 : vector<8x1xf32> to vector<8x256xf32>
    %82 = arith.addf %80, %81 : vector<8x256xf32>
    %c0_46 = arith.constant 0 : index
    %c0_47 = arith.constant 0 : index
    %83 = vector.load %arg9[%c0_46, %c0_47] : memref<8x1xf32, #tpu.memory_space<vmem>>, vector<8x1xf32>
    %c1_i32_48 = arith.constant 1 : i32
    %84 = tpu.dynamic_rotate %82 by %c1_i32_48 dim 1 : vector<8x256xf32>, i32 -> vector<8x256xf32>
    %85 = vector.broadcast %3 : vector<1x256xf32> to vector<8x256xf32>
    %86 = arith.mulf %84, %85 : vector<8x256xf32>
    %c255_i32_49 = arith.constant 255 : i32
    %87 = tpu.dynamic_rotate %82 by %c255_i32_49 dim 1 : vector<8x256xf32>, i32 -> vector<8x256xf32>
    %88 = vector.broadcast %4 : vector<1x256xf32> to vector<8x256xf32>
    %89 = arith.mulf %87, %88 : vector<8x256xf32>
    %90 = tpu.concatenate %86, %82, %89 in 0 : vector<8x256xf32>, vector<8x256xf32>, vector<8x256xf32> -> vector<24x256xf32>
    %c16_i32_50 = arith.constant 16 : i32
    %91 = tpu.dynamic_rotate %90 by %c16_i32_50 dim 1 : vector<24x256xf32>, i32 -> vector<24x256xf32>
    %92 = vector.broadcast %5 : vector<1x256xf32> to vector<24x256xf32>
    %93 = arith.mulf %91, %92 : vector<24x256xf32>
    %c0_51 = arith.constant 0 : index
    %c0_52 = arith.constant 0 : index
    %c0_53 = arith.constant 0 : index
    %94 = vector.load %arg8[%c0_51, %c0_52, %c0_53] : memref<3x8x24xbf16, #tpu.memory_space<vmem>>, vector<1x8x24xbf16>
    %95 = vector.shape_cast %94 : vector<1x8x24xbf16> to vector<8x24xbf16>
    %96 = arith.truncf %93 : vector<24x256xf32> to vector<24x256xbf16>
    %cst_54 = arith.constant dense<0.000000e+00> : vector<8x256xf32>
    %97 = tpu.matmul %95, %96, %cst_54 {dimension_numbers = #tpu.dot_dimension_numbers<[1], [0], [0], [1], [0, 0, 1, 1], [], []>} : vector<8x24xbf16>, vector<24x256xbf16>, vector<8x256xf32> -> vector<8x256xf32>
    %98 = vector.broadcast %83 : vector<8x1xf32> to vector<8x256xf32>
    %99 = arith.addf %98, %97 : vector<8x256xf32>
    %c1_55 = arith.constant 1 : index
    %c0_56 = arith.constant 0 : index
    %c0_57 = arith.constant 0 : index
    %100 = vector.load %arg8[%c1_55, %c0_56, %c0_57] : memref<3x8x24xbf16, #tpu.memory_space<vmem>>, vector<1x8x24xbf16>
    %101 = vector.shape_cast %100 : vector<1x8x24xbf16> to vector<8x24xbf16>
    %102 = arith.truncf %90 : vector<24x256xf32> to vector<24x256xbf16>
    %cst_58 = arith.constant dense<0.000000e+00> : vector<8x256xf32>
    %103 = tpu.matmul %101, %102, %cst_58 {dimension_numbers = #tpu.dot_dimension_numbers<[1], [0], [0], [1], [0, 0, 1, 1], [], []>} : vector<8x24xbf16>, vector<24x256xbf16>, vector<8x256xf32> -> vector<8x256xf32>
    %104 = arith.addf %99, %103 : vector<8x256xf32>
    %c240_i32_59 = arith.constant 240 : i32
    %105 = tpu.dynamic_rotate %90 by %c240_i32_59 dim 1 : vector<24x256xf32>, i32 -> vector<24x256xf32>
    %106 = vector.broadcast %6 : vector<1x256xf32> to vector<24x256xf32>
    %107 = arith.mulf %105, %106 : vector<24x256xf32>
    %c2_60 = arith.constant 2 : index
    %c0_61 = arith.constant 0 : index
    %c0_62 = arith.constant 0 : index
    %108 = vector.load %arg8[%c2_60, %c0_61, %c0_62] : memref<3x8x24xbf16, #tpu.memory_space<vmem>>, vector<1x8x24xbf16>
    %109 = vector.shape_cast %108 : vector<1x8x24xbf16> to vector<8x24xbf16>
    %110 = arith.truncf %107 : vector<24x256xf32> to vector<24x256xbf16>
    %cst_63 = arith.constant dense<0.000000e+00> : vector<8x256xf32>
    %111 = tpu.matmul %109, %110, %cst_63 {dimension_numbers = #tpu.dot_dimension_numbers<[1], [0], [0], [1], [0, 0, 1, 1], [], []>} : vector<8x24xbf16>, vector<24x256xbf16>, vector<8x256xf32> -> vector<8x256xf32>
    %112 = arith.addf %104, %111 : vector<8x256xf32>
    %c0_64 = arith.constant 0 : index
    %c0_65 = arith.constant 0 : index
    %113 = vector.load %arg10[%c0_64, %c0_65] : memref<8x1xf32, #tpu.memory_space<vmem>>, vector<8x1xf32>
    %c0_66 = arith.constant 0 : index
    %c0_67 = arith.constant 0 : index
    %114 = vector.load %arg11[%c0_66, %c0_67] : memref<8x1xf32, #tpu.memory_space<vmem>>, vector<8x1xf32>
    %cst_68 = arith.constant dense<0.000000e+00> : vector<8xf32>
    %115 = vector.multi_reduction <add>, %112, %cst_68 [1] : vector<8x256xf32> to vector<8xf32>
    %116 = vector.shape_cast %115 : vector<8xf32> to vector<8x1xf32>
    %cst_69 = arith.constant dense<0.000000e+00> : vector<8x1xf32>
    %117 = tpu.matmul %7, %116, %cst_69 {dimension_numbers = #tpu.dot_dimension_numbers<[1], [0], [0], [1], [0, 0, 1, 1], [], []>} : vector<8x8xf32>, vector<8x1xf32>, vector<8x1xf32> -> vector<8x1xf32>
    %cst_70 = arith.constant dense<0.000000e+00> : vector<8x1xf32>
    %118 = tpu.matmul %8, %117, %cst_70 {dimension_numbers = #tpu.dot_dimension_numbers<[1], [0], [0], [1], [0, 0, 1, 1], [], []>} : vector<8x8xf32>, vector<8x1xf32>, vector<8x1xf32> -> vector<8x1xf32>
    %119 = vector.broadcast %118 : vector<8x1xf32> to vector<8x256xf32>
    %120 = arith.subf %112, %119 : vector<8x256xf32>
    %121 = arith.mulf %120, %120 : vector<8x256xf32>
    %cst_71 = arith.constant dense<0.000000e+00> : vector<8xf32>
    %122 = vector.multi_reduction <add>, %121, %cst_71 [1] : vector<8x256xf32> to vector<8xf32>
    %123 = vector.shape_cast %122 : vector<8xf32> to vector<8x1xf32>
    %cst_72 = arith.constant dense<0.000000e+00> : vector<8x1xf32>
    %124 = tpu.matmul %7, %123, %cst_72 {dimension_numbers = #tpu.dot_dimension_numbers<[1], [0], [0], [1], [0, 0, 1, 1], [], []>} : vector<8x8xf32>, vector<8x1xf32>, vector<8x1xf32> -> vector<8x1xf32>
    %cst_73 = arith.constant dense<0.000000e+00> : vector<8x1xf32>
    %125 = tpu.matmul %8, %124, %cst_73 {dimension_numbers = #tpu.dot_dimension_numbers<[1], [0], [0], [1], [0, 0, 1, 1], [], []>} : vector<8x8xf32>, vector<8x1xf32>, vector<8x1xf32> -> vector<8x1xf32>
    %cst_74 = arith.constant 9.99999974E-6 : f32
    %126 = vector.broadcast %cst_74 : f32 to vector<8x1xf32>
    %127 = arith.addf %125, %126 : vector<8x1xf32>
    %128 = math.rsqrt %127 : vector<8x1xf32>
    %129 = vector.broadcast %128 : vector<8x1xf32> to vector<8x256xf32>
    %130 = arith.mulf %120, %129 : vector<8x256xf32>
    %131 = vector.broadcast %113 : vector<8x1xf32> to vector<8x256xf32>
    %132 = arith.mulf %130, %131 : vector<8x256xf32>
    %133 = vector.broadcast %114 : vector<8x1xf32> to vector<8x256xf32>
    %134 = arith.addf %132, %133 : vector<8x256xf32>
    %cst_75 = arith.constant 0.000000e+00 : f32
    %135 = vector.broadcast %cst_75 : f32 to vector<8x256xf32>
    %136 = arith.subf %135, %134 : vector<8x256xf32>
    %137 = math.exp %136 : vector<8x256xf32>
    %cst_76 = arith.constant 1.000000e+00 : f32
    %138 = vector.broadcast %cst_76 : f32 to vector<8x256xf32>
    %139 = arith.addf %138, %137 : vector<8x256xf32>
    %140 = arith.divf %134, %139 : vector<8x256xf32>
    %c0_77 = arith.constant 0 : index
    %c0_78 = arith.constant 0 : index
    %141 = vector.load %arg12[%c0_77, %c0_78] : memref<8x4xbf16, #tpu.memory_space<vmem>>, vector<8x4xbf16>
    %142 = arith.truncf %1 : vector<4x256xf32> to vector<4x256xbf16>
    %cst_79 = arith.constant dense<0.000000e+00> : vector<8x256xf32>
    %143 = tpu.matmul %141, %142, %cst_79 {dimension_numbers = #tpu.dot_dimension_numbers<[1], [0], [0], [1], [0, 0, 1, 1], [], []>} : vector<8x4xbf16>, vector<4x256xbf16>, vector<8x256xf32> -> vector<8x256xf32>
    %c0_80 = arith.constant 0 : index
    %c0_81 = arith.constant 0 : index
    %144 = vector.load %arg13[%c0_80, %c0_81] : memref<8x1xf32, #tpu.memory_space<vmem>>, vector<8x1xf32>
    %145 = vector.broadcast %144 : vector<8x1xf32> to vector<8x256xf32>
    %146 = arith.addf %143, %145 : vector<8x256xf32>
    %147 = arith.addf %140, %146 : vector<8x256xf32>
    %c0_82 = arith.constant 0 : index
    %c0_83 = arith.constant 0 : index
    %c0_84 = arith.constant 0 : index
    %148 = vector.load %arg20[%c0_82, %c0_83, %c0_84] : memref<1x8x256xf32, #tpu.memory_space<vmem>>, vector<1x8x256xf32>
    %149 = vector.shape_cast %148 : vector<1x8x256xf32> to vector<8x256xf32>
    %150 = vector.shape_cast %147 : vector<8x256xf32> to vector<1x8x256xf32>
    tpu.vector_store %arg20[%c0_82, %c0_83, %c0_84], %150 {strides = array<i32>} : memref<1x8x256xf32, #tpu.memory_space<vmem>>, vector<1x8x256xf32>,
    return
  }
  func.func @transform_0(%arg0: i32) -> (i32, i32, i32) {
    %c0_i32 = arith.constant 0 : i32
    %c0_i32_0 = arith.constant 0 : i32
    %c0_i32_1 = arith.constant 0 : i32
    return %arg0, %c0_i32, %c0_i32_0 : i32, i32, i32
  }
  func.func @transform_1(%arg0: i32) -> (i32, i32, i32) {
    %c0_i32 = arith.constant 0 : i32
    %c0_i32_0 = arith.constant 0 : i32
    %c0_i32_1 = arith.constant 0 : i32
    return %arg0, %c0_i32, %c0_i32_0 : i32, i32, i32
  }
  func.func @transform_2(%arg0: i32) -> (i32, i32) {
    %c0_i32 = arith.constant 0 : i32
    %c0_i32_0 = arith.constant 0 : i32
    %c0_i32_1 = arith.constant 0 : i32
    return %c0_i32, %c0_i32_0 : i32, i32
  }
  func.func @transform_3(%arg0: i32) -> (i32, i32, i32) {
    %c0_i32 = arith.constant 0 : i32
    %c0_i32_0 = arith.constant 0 : i32
    %c0_i32_1 = arith.constant 0 : i32
    %c0_i32_2 = arith.constant 0 : i32
    return %c0_i32, %c0_i32_0, %c0_i32_1 : i32, i32, i32
  }
  func.func @transform_4(%arg0: i32) -> (i32, i32) {
    %c0_i32 = arith.constant 0 : i32
    %c0_i32_0 = arith.constant 0 : i32
    %c0_i32_1 = arith.constant 0 : i32
    return %c0_i32, %c0_i32_0 : i32, i32
  }
  func.func @transform_5(%arg0: i32) -> (i32, i32) {
    %c0_i32 = arith.constant 0 : i32
    %c0_i32_0 = arith.constant 0 : i32
    %c0_i32_1 = arith.constant 0 : i32
    return %c0_i32, %c0_i32_0 : i32, i32
  }
  func.func @transform_6(%arg0: i32) -> (i32, i32) {
    %c0_i32 = arith.constant 0 : i32
    %c0_i32_0 = arith.constant 0 : i32
    %c0_i32_1 = arith.constant 0 : i32
    return %c0_i32, %c0_i32_0 : i32, i32
  }
  func.func @transform_7(%arg0: i32) -> (i32, i32, i32) {
    %c0_i32 = arith.constant 0 : i32
    %c0_i32_0 = arith.constant 0 : i32
    %c0_i32_1 = arith.constant 0 : i32
    %c0_i32_2 = arith.constant 0 : i32
    return %c0_i32, %c0_i32_0, %c0_i32_1 : i32, i32, i32
  }
  func.func @transform_8(%arg0: i32) -> (i32, i32) {
    %c0_i32 = arith.constant 0 : i32
    %c0_i32_0 = arith.constant 0 : i32
    %c0_i32_1 = arith.constant 0 : i32
    return %c0_i32, %c0_i32_0 : i32, i32
  }
  func.func @transform_9(%arg0: i32) -> (i32, i32) {
    %c0_i32 = arith.constant 0 : i32
    %c0_i32_0 = arith.constant 0 : i32
    %c0_i32_1 = arith.constant 0 : i32
    return %c0_i32, %c0_i32_0 : i32, i32
  }
  func.func @transform_10(%arg0: i32) -> (i32, i32) {
    %c0_i32 = arith.constant 0 : i32
    %c0_i32_0 = arith.constant 0 : i32
    %c0_i32_1 = arith.constant 0 : i32
    return %c0_i32, %c0_i32_0 : i32, i32
  }
  func.func @transform_11(%arg0: i32) -> (i32, i32) {
    %c0_i32 = arith.constant 0 : i32
    %c0_i32_0 = arith.constant 0 : i32
    %c0_i32_1 = arith.constant 0 : i32
    return %c0_i32, %c0_i32_0 : i32, i32
  }
  func.func @transform_12(%arg0: i32) -> (i32, i32) {
    %c0_i32 = arith.constant 0 : i32
    %c0_i32_0 = arith.constant 0 : i32
    %c0_i32_1 = arith.constant 0 : i32
    return %c0_i32, %c0_i32_0 : i32, i32
  }
  func.func @transform_13(%arg0: i32) -> (i32, i32) {
    %c0_i32 = arith.constant 0 : i32
    %c0_i32_0 = arith.constant 0 : i32
    %c0_i32_1 = arith.constant 0 : i32
    return %c0_i32, %c0_i32_0 : i32, i32
  }
  func.func @transform_14(%arg0: i32) -> (i32, i32) {
    %c0_i32 = arith.constant 0 : i32
    %c0_i32_0 = arith.constant 0 : i32
    %c0_i32_1 = arith.constant 0 : i32
    return %c0_i32, %c0_i32_0 : i32, i32
  }
  func.func @transform_15(%arg0: i32) -> (i32, i32) {
    %c0_i32 = arith.constant 0 : i32
    %c0_i32_0 = arith.constant 0 : i32
    %c0_i32_1 = arith.constant 0 : i32
    return %c0_i32, %c0_i32_0 : i32, i32
  }
  func.func @transform_16(%arg0: i32) -> (i32, i32) {
    %c0_i32 = arith.constant 0 : i32
    %c0_i32_0 = arith.constant 0 : i32
    %c0_i32_1 = arith.constant 0 : i32
    return %c0_i32, %c0_i32_0 : i32, i32
  }
  func.func @transform_17(%arg0: i32) -> (i32, i32) {
    %c0_i32 = arith.constant 0 : i32
    %c0_i32_0 = arith.constant 0 : i32
    %c0_i32_1 = arith.constant 0 : i32
    return %c0_i32, %c0_i32_0 : i32, i32
  }
  func.func @transform_18(%arg0: i32) -> (i32, i32) {
    %c0_i32 = arith.constant 0 : i32
    %c0_i32_0 = arith.constant 0 : i32
    %c0_i32_1 = arith.constant 0 : i32
    return %c0_i32, %c0_i32_0 : i32, i32
  }
  func.func @transform_19(%arg0: i32) -> (i32, i32, i32) {
    %c0_i32 = arith.constant 0 : i32
    %c0_i32_0 = arith.constant 0 : i32
    %c0_i32_1 = arith.constant 0 : i32
    return %arg0, %c0_i32, %c0_i32_0 : i32, i32, i32
  }
}

</mosaic_0001>

<llo_original>
// kernel: tpu_custom_call.1
$region0: #{tpu_custom_call.1}
  #allocation0 [shape = 'u32[]', space=smem, size = 0x4, offset = 0x4, fixed_abs, tag = 'smem constant byte address 0x4 - core index']
  #allocation1 [shape = 'u32[144,128]{1,0:T(1,128)}', space=vmem, size = 0x12000, scoped, tag = 'internal scratch']
  %s0 = inlined_call_operand.vmem [shape: f32[2,4,256], index: 0, kind: input, shape index: {}]
  %s1 = inlined_call_operand.vmem [shape: f32[2,32,1], index: 1, kind: input, shape index: {}]
  %s2 = inlined_call_operand.vmem [shape: f32[4,256], index: 2, kind: input, shape index: {}]
  %s3 = inlined_call_operand.vmem [shape: bf16[3,8,12], index: 3, kind: input, shape index: {}]
  %s4 = inlined_call_operand.vmem [shape: f32[8,1], index: 4, kind: input, shape index: {}]
  %s5 = inlined_call_operand.vmem [shape: f32[8,1], index: 5, kind: input, shape index: {}]
  %s6 = inlined_call_operand.vmem [shape: f32[8,1], index: 6, kind: input, shape index: {}]
  %s7 = inlined_call_operand.vmem [shape: bf16[3,8,24], index: 7, kind: input, shape index: {}]
  %s8 = inlined_call_operand.vmem [shape: f32[8,1], index: 8, kind: input, shape index: {}]
  %s9 = inlined_call_operand.vmem [shape: f32[8,1], index: 9, kind: input, shape index: {}]
  %s10 = inlined_call_operand.vmem [shape: f32[8,1], index: 10, kind: input, shape index: {}]
  %s11 = inlined_call_operand.vmem [shape: bf16[8,4], index: 11, kind: input, shape index: {}]
  %s12 = inlined_call_operand.vmem [shape: f32[8,1], index: 12, kind: input, shape index: {}]
  %s13 = inlined_call_operand.vmem [shape: f32[8,32], index: 13, kind: input, shape index: {}]
  %s14 = inlined_call_operand.vmem [shape: f32[8,1], index: 14, kind: input, shape index: {}]
  %s15 = inlined_call_operand.vmem [shape: f32[8,32], index: 15, kind: input, shape index: {}]
  %s16 = inlined_call_operand.vmem [shape: f32[8,1], index: 16, kind: input, shape index: {}]
  %s17 = inlined_call_operand.vmem [shape: f32[8,8], index: 17, kind: input, shape index: {}]
  %s18 = inlined_call_operand.vmem [shape: f32[8,8], index: 18, kind: input, shape index: {}]
  %s19 = inlined_call_operand.hbm [shape: f32[2,8,256], index: 19, kind: output, shape index: {}]
  %s20 = sld [smem:[#allocation0]]
  $region109: #{tpu_custom_call.1} parent=0
    _
  %s22 = ssub.s32 1, %s20
  %s23 = scalar_select 0, %s22, %s20
  $region1: #{tpu_custom_call.1} parent=0
    #allocation2 [shape = 'u8[16384]{0}', space=vmem, size = 0x4000, scoped, tag = 'output window, operand 0']
    #allocation3 [shape = 's32[2]{0}', space=sflag, size = 0x8, scoped, tag = 'scoped memory for tpu_custom_call.1']
    %24 = vsyncpa [#allocation3], 0
    %s25 = scalar_lea.sflag [#allocation3], 1
    %26 = vsyncpa %s25, 0
    loop: start=0, step=1, limit=4
    $region2: #{tpu_custom_call.1} parent=1 // loop_pre_header
      _
    $region3: #{tpu_custom_call.1} parent=1 // loop_header
      %s28 = sphi 0, %s32
      %p29 = scmp.ge.s32.totalorder %s28, 4
      %s38 = sphi 0, %s40
      %s41 = sphi 0, %s38
      %s42 = sphi 0, %s41
      %s58 = sphi 0, %s42
      %s64 = sphi 0, %s66
      %s67 = sphi 0, %s64
      %s68 = sphi 0, %s67
      %s84 = sphi 0, %s68
      %s88 = sphi 0, %s88
      %s90 = sphi 0, %s88
      %s91 = sphi 0, %s90
      %s105 = sphi 0, %s91
      %s109 = sphi 0, %s109
      %s111 = sphi 0, %s109
      %s112 = sphi 0, %s111
      %s126 = sphi 0, %s112
      %s130 = sphi 0, %s130
      %s132 = sphi 0, %s130
      %s133 = sphi 0, %s132
      %s147 = sphi 0, %s133
      %s151 = sphi 0, %s151
      %s153 = sphi 0, %s151
      %s154 = sphi 0, %s153
      %s168 = sphi 0, %s154
      %s172 = sphi 0, %s172
      %s174 = sphi 0, %s172
      %s175 = sphi 0, %s174
      %s189 = sphi 0, %s175
      %s193 = sphi 0, %s193
      %s195 = sphi 0, %s193
      %s196 = sphi 0, %s195
      %s210 = sphi 0, %s196
      %s214 = sphi 0, %s214
      %s216 = sphi 0, %s214
      %s217 = sphi 0, %s216
      %s231 = sphi 0, %s217
      %s235 = sphi 0, %s235
      %s237 = sphi 0, %s235
      %s238 = sphi 0, %s237
      %s252 = sphi 0, %s238
      %s256 = sphi 0, %s256
      %s258 = sphi 0, %s256
      %s259 = sphi 0, %s258
      %s273 = sphi 0, %s259
      %s277 = sphi 0, %s277
      %s279 = sphi 0, %s277
      %s280 = sphi 0, %s279
      %s294 = sphi 0, %s280
      %s298 = sphi 0, %s298
      %s300 = sphi 0, %s298
      %s301 = sphi 0, %s300
      %s315 = sphi 0, %s301
      %s319 = sphi 0, %s319
      %s321 = sphi 0, %s319
      %s322 = sphi 0, %s321
      %s336 = sphi 0, %s322
      %s340 = sphi 0, %s340
      %s342 = sphi 0, %s340
      %s343 = sphi 0, %s342
      %s357 = sphi 0, %s343
      %s361 = sphi 0, %s361
      %s363 = sphi 0, %s361
      %s364 = sphi 0, %s363
      %s378 = sphi 0, %s364
      %s382 = sphi 0, %s382
      %s384 = sphi 0, %s382
      %s385 = sphi 0, %s384
      %s399 = sphi 0, %s385
      %s403 = sphi 0, %s403
      %s405 = sphi 0, %s403
      %s406 = sphi 0, %s405
      %s420 = sphi 0, %s406
      %s424 = sphi 0, %s424
      %s426 = sphi 0, %s424
      %s427 = sphi 0, %s426
      %s441 = sphi 0, %s427
      %s447 = sphi 0, %s449
      %s450 = sphi 0, %s447
      %s451 = sphi 0, %s450
      %s467 = sphi 0, %s451
    $region4: #{tpu_custom_call.1} parent=1 // loop_header_branch
      %31 = sbr.rel (%p29) target = $region8
    $region5: #{tpu_custom_call.1} parent=1 // loop_body
      %s33 = ssub.s32 %s28, 1
      %s34 = ssub.s32 %s28, 2
      %s35 = sadd.s32 %s28, 1
      %s36 = ssub.s32 %s28, %s35
      %p37 = scmp.eq.s32.totalorder %s36, 0
      %s39 = sadd.s32 %s38, 1
      %s40 = scalar_select %p37, %s38, %s39
      %p43 = pneg %p37
      %p44 = scmp.eq.s32.totalorder %s28, 1
      %p45 = por %p43, %p44
      %p46 = scmp.ne.s32.totalorder %s38, %s41
      %p47 = scmp.eq.s32.totalorder %s28, 0
      %p48 = por %p46, %p47
      %p49 = scmp.ne.s32.totalorder %s38, %s41
      %p50 = scmp.eq.s32.totalorder %s33, 1
      %p51 = por %p49, %p50
      %p52 = scmp.ne.s32.totalorder %s41, %s42
      %p53 = scmp.eq.s32.totalorder %s33, 0
      %p54 = por %p52, %p53
      %p55 = scmp.ne.s32.totalorder %s41, %s42
      %p56 = scmp.eq.s32.totalorder %s34, 1
      %p57 = por %p55, %p56
      %p59 = scmp.ne.s32.totalorder %s42, %s58
      %p60 = scmp.eq.s32.totalorder %s34, 0
      %p61 = por %p59, %p60
      %s62 = ssub.s32 %s28, %s35
      %p63 = scmp.eq.s32.totalorder %s62, 0
      %s65 = sadd.s32 %s64, 1
      %s66 = scalar_select %p63, %s64, %s65
      %p69 = pneg %p63
      %p70 = scmp.eq.s32.totalorder %s28, 1
      %p71 = por %p69, %p70
      %p72 = scmp.ne.s32.totalorder %s64, %s67
      %p73 = scmp.eq.s32.totalorder %s28, 0
      %p74 = por %p72, %p73
      %p75 = scmp.ne.s32.totalorder %s64, %s67
      %p76 = scmp.eq.s32.totalorder %s33, 1
      %p77 = por %p75, %p76
      %p78 = scmp.ne.s32.totalorder %s67, %s68
      %p79 = scmp.eq.s32.totalorder %s33, 0
      %p80 = por %p78, %p79
      %p81 = scmp.ne.s32.totalorder %s67, %s68
      %p82 = scmp.eq.s32.totalorder %s34, 1
      %p83 = por %p81, %p82
      %p85 = scmp.ne.s32.totalorder %s68, %s84
      %p86 = scmp.eq.s32.totalorder %s34, 0
      %p87 = por %p85, %p86
      %s89 = sadd.s32 %s88, 1
      %p92 = scmp.eq.s32.totalorder %s28, 1
      %p93 = scmp.ne.s32.totalorder %s88, %s90
      %p94 = scmp.eq.s32.totalorder %s28, 0
      %p95 = por %p93, %p94
      %p96 = scmp.ne.s32.totalorder %s88, %s90
      %p97 = scmp.eq.s32.totalorder %s33, 1
      %p98 = por %p96, %p97
      %p99 = scmp.ne.s32.totalorder %s90, %s91
      %p100 = scmp.eq.s32.totalorder %s33, 0
      %p101 = por %p99, %p100
      %p102 = scmp.ne.s32.totalorder %s90, %s91
      %p103 = scmp.eq.s32.totalorder %s34, 1
      %p104 = por %p102, %p103
      %p106 = scmp.ne.s32.totalorder %s91, %s105
      %p107 = scmp.eq.s32.totalorder %s34, 0
      %p108 = por %p106, %p107
      %s110 = sadd.s32 %s109, 1
      %p113 = scmp.eq.s32.totalorder %s28, 1
      %p114 = scmp.ne.s32.totalorder %s109, %s111
      %p115 = scmp.eq.s32.totalorder %s28, 0
      %p116 = por %p114, %p115
      %p117 = scmp.ne.s32.totalorder %s109, %s111
      %p118 = scmp.eq.s32.totalorder %s33, 1
      %p119 = por %p117, %p118
      %p120 = scmp.ne.s32.totalorder %s111, %s112
      %p121 = scmp.eq.s32.totalorder %s33, 0
      %p122 = por %p120, %p121
      %p123 = scmp.ne.s32.totalorder %s111, %s112
      %p124 = scmp.eq.s32.totalorder %s34, 1
      %p125 = por %p123, %p124
      %p127 = scmp.ne.s32.totalorder %s112, %s126
      %p128 = scmp.eq.s32.totalorder %s34, 0
      %p129 = por %p127, %p128
      %s131 = sadd.s32 %s130, 1
      %p134 = scmp.eq.s32.totalorder %s28, 1
      %p135 = scmp.ne.s32.totalorder %s130, %s132
      %p136 = scmp.eq.s32.totalorder %s28, 0
      %p137 = por %p135, %p136
      %p138 = scmp.ne.s32.totalorder %s130, %s132
      %p139 = scmp.eq.s32.totalorder %s33, 1
      %p140 = por %p138, %p139
      %p141 = scmp.ne.s32.totalorder %s132, %s133
      %p142 = scmp.eq.s32.totalorder %s33, 0
      %p143 = por %p141, %p142
      %p144 = scmp.ne.s32.totalorder %s132, %s133
      %p145 = scmp.eq.s32.totalorder %s34, 1
      %p146 = por %p144, %p145
      %p148 = scmp.ne.s32.totalorder %s133, %s147
      %p149 = scmp.eq.s32.totalorder %s34, 0
      %p150 = por %p148, %p149
      %s152 = sadd.s32 %s151, 1
      %p155 = scmp.eq.s32.totalorder %s28, 1
      %p156 = scmp.ne.s32.totalorder %s151, %s153
      %p157 = scmp.eq.s32.totalorder %s28, 0
      %p158 = por %p156, %p157
      %p159 = scmp.ne.s32.totalorder %s151, %s153
      %p160 = scmp.eq.s32.totalorder %s33, 1
      %p161 = por %p159, %p160
      %p162 = scmp.ne.s32.totalorder %s153, %s154
      %p163 = scmp.eq.s32.totalorder %s33, 0
      %p164 = por %p162, %p163
      %p165 = scmp.ne.s32.totalorder %s153, %s154
      %p166 = scmp.eq.s32.totalorder %s34, 1
      %p167 = por %p165, %p166
      %p169 = scmp.ne.s32.totalorder %s154, %s168
      %p170 = scmp.eq.s32.totalorder %s34, 0
      %p171 = por %p169, %p170
      %s173 = sadd.s32 %s172, 1
      %p176 = scmp.eq.s32.totalorder %s28, 1
      %p177 = scmp.ne.s32.totalorder %s172, %s174
      %p178 = scmp.eq.s32.totalorder %s28, 0
      %p179 = por %p177, %p178
      %p180 = scmp.ne.s32.totalorder %s172, %s174
      %p181 = scmp.eq.s32.totalorder %s33, 1
      %p182 = por %p180, %p181
      %p183 = scmp.ne.s32.totalorder %s174, %s175
      %p184 = scmp.eq.s32.totalorder %s33, 0
      %p185 = por %p183, %p184
      %p186 = scmp.ne.s32.totalorder %s174, %s175
      %p187 = scmp.eq.s32.totalorder %s34, 1
      %p188 = por %p186, %p187
      %p190 = scmp.ne.s32.totalorder %s175, %s189
      %p191 = scmp.eq.s32.totalorder %s34, 0
      %p192 = por %p190, %p191
      %s194 = sadd.s32 %s193, 1
      %p197 = scmp.eq.s32.totalorder %s28, 1
      %p198 = scmp.ne.s32.totalorder %s193, %s195
      %p199 = scmp.eq.s32.totalorder %s28, 0
      %p200 = por %p198, %p199
      %p201 = scmp.ne.s32.totalorder %s193, %s195
      %p202 = scmp.eq.s32.totalorder %s33, 1
      %p203 = por %p201, %p202
      %p204 = scmp.ne.s32.totalorder %s195, %s196
      %p205 = scmp.eq.s32.totalorder %s33, 0
      %p206 = por %p204, %p205
      %p207 = scmp.ne.s32.totalorder %s195, %s196
      %p208 = scmp.eq.s32.totalorder %s34, 1
      %p209 = por %p207, %p208
      %p211 = scmp.ne.s32.totalorder %s196, %s210
      %p212 = scmp.eq.s32.totalorder %s34, 0
      %p213 = por %p211, %p212
      %s215 = sadd.s32 %s214, 1
      %p218 = scmp.eq.s32.totalorder %s28, 1
      %p219 = scmp.ne.s32.totalorder %s214, %s216
      %p220 = scmp.eq.s32.totalorder %s28, 0
      %p221 = por %p219, %p220
      %p222 = scmp.ne.s32.totalorder %s214, %s216
      %p223 = scmp.eq.s32.totalorder %s33, 1
      %p224 = por %p222, %p223
      %p225 = scmp.ne.s32.totalorder %s216, %s217
      %p226 = scmp.eq.s32.totalorder %s33, 0
      %p227 = por %p225, %p226
      %p228 = scmp.ne.s32.totalorder %s216, %s217
      %p229 = scmp.eq.s32.totalorder %s34, 1
      %p230 = por %p228, %p229
      %p232 = scmp.ne.s32.totalorder %s217, %s231
      %p233 = scmp.eq.s32.totalorder %s34, 0
      %p234 = por %p232, %p233
      %s236 = sadd.s32 %s235, 1
      %p239 = scmp.eq.s32.totalorder %s28, 1
      %p240 = scmp.ne.s32.totalorder %s235, %s237
      %p241 = scmp.eq.s32.totalorder %s28, 0
      %p242 = por %p240, %p241
      %p243 = scmp.ne.s32.totalorder %s235, %s237
      %p244 = scmp.eq.s32.totalorder %s33, 1
      %p245 = por %p243, %p244
      %p246 = scmp.ne.s32.totalorder %s237, %s238
      %p247 = scmp.eq.s32.totalorder %s33, 0
      %p248 = por %p246, %p247
      %p249 = scmp.ne.s32.totalorder %s237, %s238
      %p250 = scmp.eq.s32.totalorder %s34, 1
      %p251 = por %p249, %p250
      %p253 = scmp.ne.s32.totalorder %s238, %s252
      %p254 = scmp.eq.s32.totalorder %s34, 0
      %p255 = por %p253, %p254
      %s257 = sadd.s32 %s256, 1
      %p260 = scmp.eq.s32.totalorder %s28, 1
      %p261 = scmp.ne.s32.totalorder %s256, %s258
      %p262 = scmp.eq.s32.totalorder %s28, 0
      %p263 = por %p261, %p262
      %p264 = scmp.ne.s32.totalorder %s256, %s258
      %p265 = scmp.eq.s32.totalorder %s33, 1
      %p266 = por %p264, %p265
      %p267 = scmp.ne.s32.totalorder %s258, %s259
      %p268 = scmp.eq.s32.totalorder %s33, 0
      %p269 = por %p267, %p268
      %p270 = scmp.ne.s32.totalorder %s258, %s259
      %p271 = scmp.eq.s32.totalorder %s34, 1
      %p272 = por %p270, %p271
      %p274 = scmp.ne.s32.totalorder %s259, %s273
      %p275 = scmp.eq.s32.totalorder %s34, 0
      %p276 = por %p274, %p275
      %s278 = sadd.s32 %s277, 1
      %p281 = scmp.eq.s32.totalorder %s28, 1
      %p282 = scmp.ne.s32.totalorder %s277, %s279
      %p283 = scmp.eq.s32.totalorder %s28, 0
      %p284 = por %p282, %p283
      %p285 = scmp.ne.s32.totalorder %s277, %s279
      %p286 = scmp.eq.s32.totalorder %s33, 1
      %p287 = por %p285, %p286
      %p288 = scmp.ne.s32.totalorder %s279, %s280
      %p289 = scmp.eq.s32.totalorder %s33, 0
      %p290 = por %p288, %p289
      %p291 = scmp.ne.s32.totalorder %s279, %s280
      %p292 = scmp.eq.s32.totalorder %s34, 1
      %p293 = por %p291, %p292
      %p295 = scmp.ne.s32.totalorder %s280, %s294
      %p296 = scmp.eq.s32.totalorder %s34, 0
      %p297 = por %p295, %p296
      %s299 = sadd.s32 %s298, 1
      %p302 = scmp.eq.s32.totalorder %s28, 1
      %p303 = scmp.ne.s32.totalorder %s298, %s300
      %p304 = scmp.eq.s32.totalorder %s28, 0
      %p305 = por %p303, %p304
      %p306 = scmp.ne.s32.totalorder %s298, %s300
      %p307 = scmp.eq.s32.totalorder %s33, 1
      %p308 = por %p306, %p307
      %p309 = scmp.ne.s32.totalorder %s300, %s301
      %p310 = scmp.eq.s32.totalorder %s33, 0
      %p311 = por %p309, %p310
      %p312 = scmp.ne.s32.totalorder %s300, %s301
      %p313 = scmp.eq.s32.totalorder %s34, 1
      %p314 = por %p312, %p313
      %p316 = scmp.ne.s32.totalorder %s301, %s315
      %p317 = scmp.eq.s32.totalorder %s34, 0
      %p318 = por %p316, %p317
      %s320 = sadd.s32 %s319, 1
      %p323 = scmp.eq.s32.totalorder %s28, 1
      %p324 = scmp.ne.s32.totalorder %s319, %s321
      %p325 = scmp.eq.s32.totalorder %s28, 0
      %p326 = por %p324, %p325
      %p327 = scmp.ne.s32.totalorder %s319, %s321
      %p328 = scmp.eq.s32.totalorder %s33, 1
      %p329 = por %p327, %p328
      %p330 = scmp.ne.s32.totalorder %s321, %s322
      %p331 = scmp.eq.s32.totalorder %s33, 0
      %p332 = por %p330, %p331
      %p333 = scmp.ne.s32.totalorder %s321, %s322
      %p334 = scmp.eq.s32.totalorder %s34, 1
      %p335 = por %p333, %p334
      %p337 = scmp.ne.s32.totalorder %s322, %s336
      %p338 = scmp.eq.s32.totalorder %s34, 0
      %p339 = por %p337, %p338
      %s341 = sadd.s32 %s340, 1
      %p344 = scmp.eq.s32.totalorder %s28, 1
      %p345 = scmp.ne.s32.totalorder %s340, %s342
      %p346 = scmp.eq.s32.totalorder %s28, 0
      %p347 = por %p345, %p346
      %p348 = scmp.ne.s32.totalorder %s340, %s342
      %p349 = scmp.eq.s32.totalorder %s33, 1
      %p350 = por %p348, %p349
      %p351 = scmp.ne.s32.totalorder %s342, %s343
      %p352 = scmp.eq.s32.totalorder %s33, 0
      %p353 = por %p351, %p352
      %p354 = scmp.ne.s32.totalorder %s342, %s343
      %p355 = scmp.eq.s32.totalorder %s34, 1
      %p356 = por %p354, %p355
      %p358 = scmp.ne.s32.totalorder %s343, %s357
      %p359 = scmp.eq.s32.totalorder %s34, 0
      %p360 = por %p358, %p359
      %s362 = sadd.s32 %s361, 1
      %p365 = scmp.eq.s32.totalorder %s28, 1
      %p366 = scmp.ne.s32.totalorder %s361, %s363
      %p367 = scmp.eq.s32.totalorder %s28, 0
      %p368 = por %p366, %p367
      %p369 = scmp.ne.s32.totalorder %s361, %s363
      %p370 = scmp.eq.s32.totalorder %s33, 1
      %p371 = por %p369, %p370
      %p372 = scmp.ne.s32.totalorder %s363, %s364
      %p373 = scmp.eq.s32.totalorder %s33, 0
      %p374 = por %p372, %p373
      %p375 = scmp.ne.s32.totalorder %s363, %s364
      %p376 = scmp.eq.s32.totalorder %s34, 1
      %p377 = por %p375, %p376
      %p379 = scmp.ne.s32.totalorder %s364, %s378
      %p380 = scmp.eq.s32.totalorder %s34, 0
      %p381 = por %p379, %p380
      %s383 = sadd.s32 %s382, 1
      %p386 = scmp.eq.s32.totalorder %s28, 1
      %p387 = scmp.ne.s32.totalorder %s382, %s384
      %p388 = scmp.eq.s32.totalorder %s28, 0
      %p389 = por %p387, %p388
      %p390 = scmp.ne.s32.totalorder %s382, %s384
      %p391 = scmp.eq.s32.totalorder %s33, 1
      %p392 = por %p390, %p391
      %p393 = scmp.ne.s32.totalorder %s384, %s385
      %p394 = scmp.eq.s32.totalorder %s33, 0
      %p395 = por %p393, %p394
      %p396 = scmp.ne.s32.totalorder %s384, %s385
      %p397 = scmp.eq.s32.totalorder %s34, 1
      %p398 = por %p396, %p397
      %p400 = scmp.ne.s32.totalorder %s385, %s399
      %p401 = scmp.eq.s32.totalorder %s34, 0
      %p402 = por %p400, %p401
      %s404 = sadd.s32 %s403, 1
      %p407 = scmp.eq.s32.totalorder %s28, 1
      %p408 = scmp.ne.s32.totalorder %s403, %s405
      %p409 = scmp.eq.s32.totalorder %s28, 0
      %p410 = por %p408, %p409
      %p411 = scmp.ne.s32.totalorder %s403, %s405
      %p412 = scmp.eq.s32.totalorder %s33, 1
      %p413 = por %p411, %p412
      %p414 = scmp.ne.s32.totalorder %s405, %s406
      %p415 = scmp.eq.s32.totalorder %s33, 0
      %p416 = por %p414, %p415
      %p417 = scmp.ne.s32.totalorder %s405, %s406
      %p418 = scmp.eq.s32.totalorder %s34, 1
      %p419 = por %p417, %p418
      %p421 = scmp.ne.s32.totalorder %s406, %s420
      %p422 = scmp.eq.s32.totalorder %s34, 0
      %p423 = por %p421, %p422
      %s425 = sadd.s32 %s424, 1
      %p428 = scmp.eq.s32.totalorder %s28, 1
      %p429 = scmp.ne.s32.totalorder %s424, %s426
      %p430 = scmp.eq.s32.totalorder %s28, 0
      %p431 = por %p429, %p430
      %p432 = scmp.ne.s32.totalorder %s424, %s426
      %p433 = scmp.eq.s32.totalorder %s33, 1
      %p434 = por %p432, %p433
      %p435 = scmp.ne.s32.totalorder %s426, %s427
      %p436 = scmp.eq.s32.totalorder %s33, 0
      %p437 = por %p435, %p436
      %p438 = scmp.ne.s32.totalorder %s426, %s427
      %p439 = scmp.eq.s32.totalorder %s34, 1
      %p440 = por %p438, %p439
      %p442 = scmp.ne.s32.totalorder %s427, %s441
      %p443 = scmp.eq.s32.totalorder %s34, 0
      %p444 = por %p442, %p443
      %s445 = ssub.s32 %s28, %s35
      %p446 = scmp.eq.s32.totalorder %s445, 0
      %s448 = sadd.s32 %s447, 1
      %s449 = scalar_select %p446, %s447, %s448
      %p452 = pneg %p446
      %p453 = scmp.eq.s32.totalorder %s28, 1
      %p454 = por %p452, %p453
      %p455 = scmp.ne.s32.totalorder %s447, %s450
      %p456 = scmp.eq.s32.totalorder %s28, 0
      %p457 = por %p455, %p456
      %p458 = scmp.ne.s32.totalorder %s447, %s450
      %p459 = scmp.eq.s32.totalorder %s33, 1
      %p460 = por %p458, %p459
      %p461 = scmp.ne.s32.totalorder %s450, %s451
      %p462 = scmp.eq.s32.totalorder %s33, 0
      %p463 = por %p461, %p462
      %p464 = scmp.ne.s32.totalorder %s450, %s451
      %p465 = scmp.eq.s32.totalorder %s34, 1
      %p466 = por %p464, %p465
      %p468 = scmp.ne.s32.totalorder %s451, %s467
      %p469 = scmp.eq.s32.totalorder %s34, 0
      %p470 = por %p468, %p469
      %p471 = scmp.le.s32.totalorder 1, %s28
      %p472 = scmp.lt.s32.totalorder %s28, 3
      %p473 = pnand %p471, %p472
      %p474 = pneg %p473
      // Predicated region
      $region9: #{tpu_custom_call.1} parent=5 // pred_check
        _
      $region10: #{tpu_custom_call.1} parent=5 // pred_check_branch
        %476 = sbr.rel (%p473) target = $region12
      $region11: #{tpu_custom_call.1} parent=5 // pred_region
        %s477 = ssub.s32 %s28, 1
        // Predicated region
        $region13: #{tpu_custom_call.1} parent=11 // pred_check
          %p478 = pneg %p101
        $region14: #{tpu_custom_call.1} parent=11 // pred_check_branch
          %480 = sbr.rel (%p478) target = $region16
        $region15: #{tpu_custom_call.1} parent=11 // pred_region
          _
        $region16: #{tpu_custom_call.1} parent=11 // pred_fallthru
          _
        // Predicated region
        $region17: #{tpu_custom_call.1} parent=11 // pred_check
          %p481 = pneg %p122
        $region18: #{tpu_custom_call.1} parent=11 // pred_check_branch
          %483 = sbr.rel (%p481) target = $region20
        $region19: #{tpu_custom_call.1} parent=11 // pred_region
          _
        $region20: #{tpu_custom_call.1} parent=11 // pred_fallthru
          _
        // Predicated region
        $region21: #{tpu_custom_call.1} parent=11 // pred_check
          %p484 = pneg %p143
        $region22: #{tpu_custom_call.1} parent=11 // pred_check_branch
          %486 = sbr.rel (%p484) target = $region24
        $region23: #{tpu_custom_call.1} parent=11 // pred_region
          _
        $region24: #{tpu_custom_call.1} parent=11 // pred_fallthru
          _
        // Predicated region
        $region25: #{tpu_custom_call.1} parent=11 // pred_check
          %p487 = pneg %p164
        $region26: #{tpu_custom_call.1} parent=11 // pred_check_branch
          %489 = sbr.rel (%p487) target = $region28
        $region27: #{tpu_custom_call.1} parent=11 // pred_region
          _
        $region28: #{tpu_custom_call.1} parent=11 // pred_fallthru
          _
        // Predicated region
        $region29: #{tpu_custom_call.1} parent=11 // pred_check
          %p490 = pneg %p185
        $region30: #{tpu_custom_call.1} parent=11 // pred_check_branch
          %492 = sbr.rel (%p490) target = $region32
        $region31: #{tpu_custom_call.1} parent=11 // pred_region
          _
        $region32: #{tpu_custom_call.1} parent=11 // pred_fallthru
          _
        // Predicated region
        $region33: #{tpu_custom_call.1} parent=11 // pred_check
          %p493 = pneg %p206
        $region34: #{tpu_custom_call.1} parent=11 // pred_check_branch
          %495 = sbr.rel (%p493) target = $region36
        $region35: #{tpu_custom_call.1} parent=11 // pred_region
          _
        $region36: #{tpu_custom_call.1} parent=11 // pred_fallthru
          _
        // Predicated region
        $region37: #{tpu_custom_call.1} parent=11 // pred_check
          %p496 = pneg %p227
        $region38: #{tpu_custom_call.1} parent=11 // pred_check_branch
          %498 = sbr.rel (%p496) target = $region40
        $region39: #{tpu_custom_call.1} parent=11 // pred_region
          _
        $region40: #{tpu_custom_call.1} parent=11 // pred_fallthru
          _
        // Predicated region
        $region41: #{tpu_custom_call.1} parent=11 // pred_check
          %p499 = pneg %p248
        $region42: #{tpu_custom_call.1} parent=11 // pred_check_branch
          %501 = sbr.rel (%p499) target = $region44
        $region43: #{tpu_custom_call.1} parent=11 // pred_region
          _
        $region44: #{tpu_custom_call.1} parent=11 // pred_fallthru
          _
        // Predicated region
        $region45: #{tpu_custom_call.1} parent=11 // pred_check
          %p502 = pneg %p269
        $region46: #{tpu_custom_call.1} parent=11 // pred_check_branch
          %504 = sbr.rel (%p502) target = $region48
        $region47: #{tpu_custom_call.1} parent=11 // pred_region
          _
        $region48: #{tpu_custom_call.1} parent=11 // pred_fallthru
          _
        // Predicated region
        $region49: #{tpu_custom_call.1} parent=11 // pred_check
          %p505 = pneg %p290
        $region50: #{tpu_custom_call.1} parent=11 // pred_check_branch
          %507 = sbr.rel (%p505) target = $region52
        $region51: #{tpu_custom_call.1} parent=11 // pred_region
          _
        $region52: #{tpu_custom_call.1} parent=11 // pred_fallthru
          _
        // Predicated region
        $region53: #{tpu_custom_call.1} parent=11 // pred_check
          %p508 = pneg %p311
        $region54: #{tpu_custom_call.1} parent=11 // pred_check_branch
          %510 = sbr.rel (%p508) target = $region56
        $region55: #{tpu_custom_call.1} parent=11 // pred_region
          _
        $region56: #{tpu_custom_call.1} parent=11 // pred_fallthru
          _
        // Predicated region
        $region57: #{tpu_custom_call.1} parent=11 // pred_check
          %p511 = pneg %p332
        $region58: #{tpu_custom_call.1} parent=11 // pred_check_branch
          %513 = sbr.rel (%p511) target = $region60
        $region59: #{tpu_custom_call.1} parent=11 // pred_region
          _
        $region60: #{tpu_custom_call.1} parent=11 // pred_fallthru
          _
        // Predicated region
        $region61: #{tpu_custom_call.1} parent=11 // pred_check
          %p514 = pneg %p353
        $region62: #{tpu_custom_call.1} parent=11 // pred_check_branch
          %516 = sbr.rel (%p514) target = $region64
        $region63: #{tpu_custom_call.1} parent=11 // pred_region
          _
        $region64: #{tpu_custom_call.1} parent=11 // pred_fallthru
          _
        // Predicated region
        $region65: #{tpu_custom_call.1} parent=11 // pred_check
          %p517 = pneg %p374
        $region66: #{tpu_custom_call.1} parent=11 // pred_check_branch
          %519 = sbr.rel (%p517) target = $region68
        $region67: #{tpu_custom_call.1} parent=11 // pred_region
          _
        $region68: #{tpu_custom_call.1} parent=11 // pred_fallthru
          _
        // Predicated region
        $region69: #{tpu_custom_call.1} parent=11 // pred_check
          %p520 = pneg %p395
        $region70: #{tpu_custom_call.1} parent=11 // pred_check_branch
          %522 = sbr.rel (%p520) target = $region72
        $region71: #{tpu_custom_call.1} parent=11 // pred_region
          _
        $region72: #{tpu_custom_call.1} parent=11 // pred_fallthru
          _
        // Predicated region
        $region73: #{tpu_custom_call.1} parent=11 // pred_check
          %p523 = pneg %p416
        $region74: #{tpu_custom_call.1} parent=11 // pred_check_branch
          %525 = sbr.rel (%p523) target = $region76
        $region75: #{tpu_custom_call.1} parent=11 // pred_region
          _
        $region76: #{tpu_custom_call.1} parent=11 // pred_fallthru
          _
        // Predicated region
        $region77: #{tpu_custom_call.1} parent=11 // pred_check
          %p526 = pneg %p437
        $region78: #{tpu_custom_call.1} parent=11 // pred_check_branch
          %528 = sbr.rel (%p526) target = $region80
        $region79: #{tpu_custom_call.1} parent=11 // pred_region
          _
        $region80: #{tpu_custom_call.1} parent=11 // pred_fallthru
          _
      $region12: #{tpu_custom_call.1} parent=5 // pred_fallthru
        _
      %p529 = scmp.lt.s32.totalorder %s28, 2
      // Predicated region
      $region81: #{tpu_custom_call.1} parent=5 // pred_check
        %p530 = pneg %p529
      $region82: #{tpu_custom_call.1} parent=5 // pred_check_branch
        %532 = sbr.rel (%p530) target = $region84
      $region83: #{tpu_custom_call.1} parent=5 // pred_region
        // Predicated region
        $region85: #{tpu_custom_call.1} parent=83 // pred_check
          %p533 = pneg %p48
        $region86: #{tpu_custom_call.1} parent=83 // pred_check_branch
          %535 = sbr.rel (%p533) target = $region88
        $region87: #{tpu_custom_call.1} parent=83 // pred_region
          %p536 = scmp.lt.s32.totalorder %s28, 1
          %s537 = scalar_select %p536, %s28, 1
          %s538 = smul.addr %s537, 2
          %s539 = smul.addr %s538, 4
          %s540 = scalar_lea.vmem %s0, %s539
        $region88: #{tpu_custom_call.1} parent=83 // pred_fallthru
          _
        // Predicated region
        $region89: #{tpu_custom_call.1} parent=83 // pred_check
          %p541 = pneg %p74
        $region90: #{tpu_custom_call.1} parent=83 // pred_check_branch
          %543 = sbr.rel (%p541) target = $region92
        $region91: #{tpu_custom_call.1} parent=83 // pred_region
          %p544 = scmp.lt.s32.totalorder %s28, 1
          %s545 = scalar_select %p544, %s28, 1
          %s546 = smul.addr %s545, 4
          %s547 = smul.addr %s546, 8
          %s548 = scalar_lea.vmem %s1, %s547
        $region92: #{tpu_custom_call.1} parent=83 // pred_fallthru
          _
      $region84: #{tpu_custom_call.1} parent=5 // pred_fallthru
        _
      %p549 = scmp.le.s32.totalorder 1, %s28
      %p550 = scmp.lt.s32.totalorder %s28, 3
      %p551 = pnand %p549, %p550
      %p552 = pneg %p551
      // Predicated region
      $region93: #{tpu_custom_call.1} parent=5 // pred_check
        _
      $region94: #{tpu_custom_call.1} parent=5 // pred_check_branch
        %554 = sbr.rel (%p551) target = $region96
      $region95: #{tpu_custom_call.1} parent=5 // pred_region
        %s555 = ssub.s32 %s28, 1
        %p556 = scmp.lt.s32.totalorder %s33, 1
        %s557 = scalar_select %p556, %s33, 1
        %s558 = smul.addr %s557, 2
        %s559 = smul.addr %s558, 4
        %s560 = scalar_lea.vmem %s0, %s559
        %p561 = pneg %p54
        %p562 = pneg %p51
        %p563 = scmp.lt.s32.totalorder %s33, 1
        %s564 = scalar_select %p563, %s33, 1
        %s565 = smul.addr %s564, 4
        %s566 = smul.addr %s565, 8
        %s567 = scalar_lea.vmem %s1, %s566
        %p568 = pneg %p80
        %p569 = pneg %p77
        %p570 = pneg %p101
        %p571 = pneg %p98
        %p572 = pneg %p122
        %p573 = pneg %p119
        %p574 = pneg %p143
        %p575 = pneg %p140
        %p576 = pneg %p164
        %p577 = pneg %p161
        %p578 = pneg %p185
        %p579 = pneg %p182
        %p580 = pneg %p206
        %p581 = pneg %p203
        %p582 = pneg %p227
        %p583 = pneg %p224
        %p584 = pneg %p248
        %p585 = pneg %p245
        %p586 = pneg %p269
        %p587 = pneg %p266
        %p588 = pneg %p290
        %p589 = pneg %p287
        %p590 = pneg %p311
        %p591 = pneg %p308
        %p592 = pneg %p332
        %p593 = pneg %p329
        %p594 = pneg %p353
        %p595 = pneg %p350
        %p596 = pneg %p374
        %p597 = pneg %p371
        %p598 = pneg %p395
        %p599 = pneg %p392
        %p600 = pneg %p416
        %p601 = pneg %p413
        %p602 = pneg %p437
        %p603 = pneg %p434
        %p604 = pneg %p463
        %p605 = pneg %p460
        %s606 = sand.u32 %s450, 1
        %s607 = scalar_lea.sflag [#allocation3], %s606
        %s608 = sand.u32 %s450, 1
        %s609 = smul.addr %s608, 16
        %s610 = scalar_lea.vmem [#allocation2], %s609
        %p611 = scmp.lt.s32.totalorder %s33, 1
        %s612 = scalar_select %p611, %s33, 1
        %s613 = smul.addr %s612, 2
        %s614 = smul.addr %s613, 4
        %s615 = scalar_lea.vmem %s0, %s614
        %p616 = scmp.lt.s32.totalorder %s33, 1
        %s617 = scalar_select %p616, %s33, 1
        %s618 = smul.addr %s617, 4
        %s619 = smul.addr %s618, 8
        %s620 = scalar_lea.vmem %s1, %s619
        %v622 = vld [vmem:[%s615] sm:$0xff]
        %v623 = vld [vmem:[%s2] sm:$0xff]
        %v624 = vld [vmem:[%s17] sm:$0xff]
        %v625 = vld [vmem:[%s18] sm:$0xff]
        %v626 = vld [vmem:[%s4] sm:$0xff]
        %v628 = vcombine.high %v622, %v622
        %630 = vrot.lane.b32.xlu0 %v622, 1
        %v631 = vpop.permute.xlu0 %630
        %632 = vrot.lane.b32.xlu0 %v628, 1
        %v633 = vpop.permute.xlu0 %632
        %v634 = vlaneseq
        %v635 = vand.u32 %v634, 127
        %vm636 = vcmp.lt.s32.totalorder %v635, 1
        %v637 = vsel %vm636, %v631, %v633
        %v638 = vsel %vm636, %v633, %v631
        %v640 = vlaneseq
        %v641 = vshrl.u32 %v640, 7
        %v642 = vsub.s32 0, %v641
        %v643 = vrot.slane %v623, %v642
        %v644 = vlaneseq
        %v645 = vshrl.u32 %v644, 7
        %v646 = vsub.s32 4, %v645
        %v647 = vrot.slane %v623, %v646
        %v650 = vlaneseq
        %v651 = vshrl.u32 %v650, 7
        %v652 = vsub.s32 0, %v651
        %v653 = vrot.slane %v643, %v652
        %v654 = vlaneseq
        %v655 = vshrl.u32 %v654, 7
        %v656 = vsub.s32 0, %v655
        %v657 = vrot.slane %v647, %v656
        %v658 = vmul.f32 %v638, %v653
        %v659 = vmul.f32 %v637, %v657
        %660 = vrot.lane.b32.xlu0 %v622, 127
        %v661 = vpop.permute.xlu0 %660
        %662 = vrot.lane.b32.xlu0 %v628, 127
        %v663 = vpop.permute.xlu0 %662
        %vm664 = vcmp.lt.s32.totalorder %v635, 127
        %v665 = vsel %vm664, %v661, %v663
        %v666 = vsel %vm664, %v663, %v661
        %v667 = vlaneseq
        %v668 = vshrl.u32 %v667, 7
        %v669 = vsub.s32 1, %v668
        %v670 = vrot.slane %v623, %v669
        %v671 = vlaneseq
        %v672 = vshrl.u32 %v671, 7
        %v673 = vsub.s32 5, %v672
        %v674 = vrot.slane %v623, %v673
        %v677 = vlaneseq
        %v678 = vshrl.u32 %v677, 7
        %v679 = vsub.s32 1, %v678
        %v680 = vrot.slane %v670, %v679
        %v681 = vlaneseq
        %v682 = vshrl.u32 %v681, 7
        %v683 = vsub.s32 1, %v682
        %v684 = vrot.slane %v674, %v683
        %v685 = vmul.f32 %v665, %v680
        %v686 = vmul.f32 %v666, %v684
        %v687 = vcombine.low %v622, %v622
        %vm689 = vcmask 1043456
        %v690 = vsel %vm689, %v658, %v687
        %v691 = vsel %vm689, %v659, %v622
        %692 = vrot.lane.b32.xlu0 %v690, 16
        %v693 = vpop.permute.xlu0 %692
        %694 = vrot.lane.b32.xlu0 %v685, 16
        %v695 = vpop.permute.xlu0 %694
        %696 = vrot.lane.b32.xlu0 %v691, 16
        %v697 = vpop.permute.xlu0 %696
        %698 = vrot.lane.b32.xlu0 %v686, 16
        %v699 = vpop.permute.xlu0 %698
        %vm700 = vcmp.lt.s32.totalorder %v635, 16
        %v701 = vsel %vm700, %v693, %v697
        %v702 = vsel %vm700, %v695, %v699
        %v703 = vsel %vm700, %v697, %v693
        %v704 = vsel %vm700, %v699, %v695
        %v705 = vlaneseq
        %v706 = vshrl.u32 %v705, 7
        %v707 = vsub.s32 2, %v706
        %v708 = vrot.slane %v623, %v707
        %v709 = vlaneseq
        %v710 = vshrl.u32 %v709, 7
        %v711 = vsub.s32 6, %v710
        %v712 = vrot.slane %v623, %v711
        %v715 = vlaneseq
        %v716 = vshrl.u32 %v715, 7
        %v717 = vsub.s32 2, %v716
        %v718 = vrot.slane %v708, %v717
        %v719 = vlaneseq
        %v720 = vshrl.u32 %v719, 7
        %v721 = vsub.s32 2, %v720
        %v722 = vrot.slane %v712, %v721
        %v723 = vmul.f32 %v703, %v718
        %v724 = vmul.f32 %v701, %v722
        %v725 = vmul.f32 %v704, %v718
        %v726 = vmul.f32 %v702, %v722
        %v727 = vld [vmem:[%s3] sm:$0xf]
        %v728 = vpack.c.bf16 %v725, %v723
        %v729 = vpack.c.bf16 %v726, %v724
        %vm730 = vcmask 97280
        %v732 = vsel %vm730, %v727, 0
        %vm734 = vcmask 1045504
        %v736 = vsel %vm734, %v728, 0
        %v739 = vsel %vm734, %v729, 0
        %741 = vmatprep.subr.bf16.mxu0 0
        %742 = vmatpush1.bf16.msra.mxu0 0
        %743 = vmatprep.subr.bf16.mxu0 0
        %744 = vmatpush1.bf16.msra.mxu0 0
        %745 = vmatprep.subr.bf16.mxu0 0
        %746 = vmatpush1.bf16.msra.mxu0 0
        %747 = vmatprep.subr.bf16.mxu0 0
        %748 = vmatpush1.bf16.msra.mxu0 0
        %749 = vmatprep.subr.bf16.mxu0 0
        %750 = vmatpush1.bf16.msra.mxu0 0
        %751 = vmatprep.subr.bf16.mxu0 0
        %752 = vmatpush1.bf16.msra.mxu0 0
        %753 = vmatprep.subr.bf16.mxu0 0
        %754 = vmatpush1.bf16.msra.mxu0 0
        %755 = vmatprep.subr.bf16.mxu0 %v739
        %756 = vmatpush1.bf16.msra.mxu0 %v736
        %757 = vmatprep.subr.bf16.mxu0 0
        %758 = vmatpush2.bf16.msra.mxu0 0
        %759 = vmatprep.subr.bf16.mxu0 0
        %760 = vmatpush2.bf16.msra.mxu0 0
        %761 = vmatprep.subr.bf16.mxu0 0
        %762 = vmatpush2.bf16.msra.mxu0 0
        %763 = vmatprep.subr.bf16.mxu0 0
        %764 = vmatpush2.bf16.msra.mxu0 0
        %765 = vmatprep.subr.bf16.mxu0 0
        %766 = vmatpush2.bf16.msra.mxu0 0
        %767 = vmatprep.subr.bf16.mxu0 0
        %768 = vmatpush2.bf16.msra.mxu0 0
        %769 = vmatprep.subr.bf16.mxu0 0
        %770 = vmatpush2.bf16.msra.mxu0 0
        %771 = vmatprep.subr.bf16.mxu0 0
        %772 = vmatpush2.bf16.msra.mxu0 0
        %773 = vmatprep.mubr.bf16.mxu0 0
        %774 = vmatmul.mubr.bf16.gmra.mxu0 %v732
        %v775 = vpop.f32.mrf.mxu0
        %v776 = vadd.f32 0.0, %v775
        %v777 = vpop.f32.mrf.mxu0
        %v778 = vadd.f32 0.0, %v777
        %v779 = vpop.f32.mrf.mxu0
        %v780 = vpop.f32.mrf.mxu0
        %781 = vdwg.mxu0
        %783 = vset.pattern.permute.xlu0 0
        %784 = vperm.xlu0 %783, %v626
        %v785 = vpop.permute.xlu0 %784
        %v787 = vadd.f32 %v785, %v776
        %v788 = vadd.f32 %v785, %v778
        %s789 = scalar_lea.vmem %s3, 4
        %v790 = vld [vmem:[%s789] sm:$0xf]
        %v791 = vpack.c.bf16 %v685, %v690
        %v792 = vpack.c.bf16 %v686, %v691
        %v794 = vsel %vm730, %v790, 0
        %v797 = vsel %vm734, %v791, 0
        %v800 = vsel %vm734, %v792, 0
        %802 = vmatprep.subr.bf16.mxu0 0
        %803 = vmatpush1.bf16.msra.mxu0 0
        %804 = vmatprep.subr.bf16.mxu0 0
        %805 = vmatpush1.bf16.msra.mxu0 0
        %806 = vmatprep.subr.bf16.mxu0 0
        %807 = vmatpush1.bf16.msra.mxu0 0
        %808 = vmatprep.subr.bf16.mxu0 0
        %809 = vmatpush1.bf16.msra.mxu0 0
        %810 = vmatprep.subr.bf16.mxu0 0
        %811 = vmatpush1.bf16.msra.mxu0 0
        %812 = vmatprep.subr.bf16.mxu0 0
        %813 = vmatpush1.bf16.msra.mxu0 0
        %814 = vmatprep.subr.bf16.mxu0 0
        %815 = vmatpush1.bf16.msra.mxu0 0
        %816 = vmatprep.subr.bf16.mxu0 %v800
        %817 = vmatpush1.bf16.msra.mxu0 %v797
        %818 = vmatprep.subr.bf16.mxu0 0
        %819 = vmatpush2.bf16.msra.mxu0 0
        %820 = vmatprep.subr.bf16.mxu0 0
        %821 = vmatpush2.bf16.msra.mxu0 0
        %822 = vmatprep.subr.bf16.mxu0 0
        %823 = vmatpush2.bf16.msra.mxu0 0
        %824 = vmatprep.subr.bf16.mxu0 0
        %825 = vmatpush2.bf16.msra.mxu0 0
        %826 = vmatprep.subr.bf16.mxu0 0
        %827 = vmatpush2.bf16.msra.mxu0 0
        %828 = vmatprep.subr.bf16.mxu0 0
        %829 = vmatpush2.bf16.msra.mxu0 0
        %830 = vmatprep.subr.bf16.mxu0 0
        %831 = vmatpush2.bf16.msra.mxu0 0
        %832 = vmatprep.subr.bf16.mxu0 0
        %833 = vmatpush2.bf16.msra.mxu0 0
        %834 = vmatprep.mubr.bf16.mxu0 0
        %835 = vmatmul.mubr.bf16.gmra.mxu0 %v794
        %v836 = vpop.f32.mrf.mxu0
        %v837 = vadd.f32 0.0, %v836
        %v838 = vpop.f32.mrf.mxu0
        %v839 = vadd.f32 0.0, %v838
        %v840 = vpop.f32.mrf.mxu0
        %v841 = vpop.f32.mrf.mxu0
        %842 = vdwg.mxu0
        %v843 = vadd.f32 %v787, %v837
        %v844 = vadd.f32 %v788, %v839
        %845 = vrot.lane.b32.xlu0 %v690, 112
        %v846 = vpop.permute.xlu0 %845
        %847 = vrot.lane.b32.xlu0 %v685, 112
        %v848 = vpop.permute.xlu0 %847
        %849 = vrot.lane.b32.xlu0 %v691, 112
        %v850 = vpop.permute.xlu0 %849
        %851 = vrot.lane.b32.xlu0 %v686, 112
        %v852 = vpop.permute.xlu0 %851
        %vm853 = vcmp.lt.s32.totalorder %v635, 112
        %v854 = vsel %vm853, %v846, %v850
        %v855 = vsel %vm853, %v848, %v852
        %v856 = vsel %vm853, %v850, %v846
        %v857 = vsel %vm853, %v852, %v848
        %v858 = vlaneseq
        %v859 = vshrl.u32 %v858, 7
        %v860 = vsub.s32 3, %v859
        %v861 = vrot.slane %v623, %v860
        %v862 = vlaneseq
        %v863 = vshrl.u32 %v862, 7
        %v864 = vsub.s32 7, %v863
        %v865 = vrot.slane %v623, %v864
        %v868 = vlaneseq
        %v869 = vshrl.u32 %v868, 7
        %v870 = vsub.s32 3, %v869
        %v871 = vrot.slane %v861, %v870
        %v872 = vlaneseq
        %v873 = vshrl.u32 %v872, 7
        %v874 = vsub.s32 3, %v873
        %v875 = vrot.slane %v865, %v874
        %v876 = vmul.f32 %v854, %v871
        %v877 = vmul.f32 %v856, %v875
        %v878 = vmul.f32 %v855, %v871
        %v879 = vmul.f32 %v857, %v875
        %s880 = scalar_lea.vmem %s3, 8
        %v881 = vld [vmem:[%s880] sm:$0xf]
        %v882 = vpack.c.bf16 %v878, %v876
        %v883 = vpack.c.bf16 %v879, %v877
        %v885 = vsel %vm730, %v881, 0
        %v888 = vsel %vm734, %v882, 0
        %v891 = vsel %vm734, %v883, 0
        %893 = vmatprep.subr.bf16.mxu0 0
        %894 = vmatpush1.bf16.msra.mxu0 0
        %895 = vmatprep.subr.bf16.mxu0 0
        %896 = vmatpush1.bf16.msra.mxu0 0
        %897 = vmatprep.subr.bf16.mxu0 0
        %898 = vmatpush1.bf16.msra.mxu0 0
        %899 = vmatprep.subr.bf16.mxu0 0
        %900 = vmatpush1.bf16.msra.mxu0 0
        %901 = vmatprep.subr.bf16.mxu0 0
        %902 = vmatpush1.bf16.msra.mxu0 0
        %903 = vmatprep.subr.bf16.mxu0 0
        %904 = vmatpush1.bf16.msra.mxu0 0
        %905 = vmatprep.subr.bf16.mxu0 0
        %906 = vmatpush1.bf16.msra.mxu0 0
        %907 = vmatprep.subr.bf16.mxu0 %v891
        %908 = vmatpush1.bf16.msra.mxu0 %v888
        %909 = vmatprep.subr.bf16.mxu0 0
        %910 = vmatpush2.bf16.msra.mxu0 0
        %911 = vmatprep.subr.bf16.mxu0 0
        %912 = vmatpush2.bf16.msra.mxu0 0
        %913 = vmatprep.subr.bf16.mxu0 0
        %914 = vmatpush2.bf16.msra.mxu0 0
        %915 = vmatprep.subr.bf16.mxu0 0
        %916 = vmatpush2.bf16.msra.mxu0 0
        %917 = vmatprep.subr.bf16.mxu0 0
        %918 = vmatpush2.bf16.msra.mxu0 0
        %919 = vmatprep.subr.bf16.mxu0 0
        %920 = vmatpush2.bf16.msra.mxu0 0
        %921 = vmatprep.subr.bf16.mxu0 0
        %922 = vmatpush2.bf16.msra.mxu0 0
        %923 = vmatprep.subr.bf16.mxu0 0
        %924 = vmatpush2.bf16.msra.mxu0 0
        %925 = vmatprep.mubr.bf16.mxu0 0
        %926 = vmatmul.mubr.bf16.gmra.mxu0 %v885
        %v927 = vpop.f32.mrf.mxu0
        %v928 = vadd.f32 0.0, %v927
        %v929 = vpop.f32.mrf.mxu0
        %v930 = vadd.f32 0.0, %v929
        %v931 = vpop.f32.mrf.mxu0
        %v932 = vpop.f32.mrf.mxu0
        %933 = vdwg.mxu0
        %v934 = vadd.f32 %v843, %v928
        %v935 = vadd.f32 %v844, %v930
        %v936 = vld [vmem:[%s5] sm:$0xff]
        %v937 = vld [vmem:[%s6] sm:$0xff]
        %v938 = vadd.f32 %v934, %v935
        %939 = vadd.xlane.f32.xlu0 %v938
        %v940 = vpop.xlane.xlu0 %939
        %vm941 = vcmask 64512
        %v943 = vsel %vm941, %v624, 0
        %945 = vmatprep.subr.mxu0 0.0
        %946 = vmatpush1.msra.mxu0 0.0
        %947 = vmatprep.subr.mxu0 0.0
        %948 = vmatpush1.msra.mxu0 0.0
        %949 = vmatprep.subr.mxu0 0.0
        %950 = vmatpush1.msra.mxu0 0.0
        %951 = vmatprep.subr.mxu0 0.0
        %952 = vmatpush1.msra.mxu0 0.0
        %953 = vmatprep.subr.mxu0 0.0
        %954 = vmatpush1.msra.mxu0 0.0
        %955 = vmatprep.subr.mxu0 0.0
        %956 = vmatpush1.msra.mxu0 0.0
        %957 = vmatprep.subr.mxu0 0.0
        %958 = vmatpush1.msra.mxu0 0.0
        %959 = vmatprep.subr.mxu0 0.0
        %960 = vmatpush1.msra.mxu0 0.0
        %961 = vmatprep.subr.mxu0 0.0
        %962 = vmatpush1.msra.mxu0 0.0
        %963 = vmatprep.subr.mxu0 0.0
        %964 = vmatpush1.msra.mxu0 0.0
        %965 = vmatprep.subr.mxu0 0.0
        %966 = vmatpush1.msra.mxu0 0.0
        %967 = vmatprep.subr.mxu0 0.0
        %968 = vmatpush1.msra.mxu0 0.0
        %969 = vmatprep.subr.mxu0 0.0
        %970 = vmatpush1.msra.mxu0 0.0
        %971 = vmatprep.subr.mxu0 0.0
        %972 = vmatpush1.msra.mxu0 0.0
        %973 = vmatprep.subr.mxu0 0.0
        %974 = vmatpush1.msra.mxu0 0.0
        %975 = vmatprep.subr.mxu0 0.0
        %976 = vmatpush1.msra.mxu0 %v940
        %977 = vmatprep.subr.mxu0 0.0
        %978 = vmatpush2.msra.mxu0 0.0
        %979 = vmatprep.subr.mxu0 0.0
        %980 = vmatpush2.msra.mxu0 0.0
        %981 = vmatprep.subr.mxu0 0.0
        %982 = vmatpush2.msra.mxu0 0.0
        %983 = vmatprep.subr.mxu0 0.0
        %984 = vmatpush2.msra.mxu0 0.0
        %985 = vmatprep.subr.mxu0 0.0
        %986 = vmatpush2.msra.mxu0 0.0
        %987 = vmatprep.subr.mxu0 0.0
        %988 = vmatpush2.msra.mxu0 0.0
        %989 = vmatprep.subr.mxu0 0.0
        %990 = vmatpush2.msra.mxu0 0.0
        %991 = vmatprep.subr.mxu0 0.0
        %992 = vmatpush2.msra.mxu0 0.0
        %993 = vmatprep.subr.mxu0 0.0
        %994 = vmatpush2.msra.mxu0 0.0
        %995 = vmatprep.subr.mxu0 0.0
        %996 = vmatpush2.msra.mxu0 0.0
        %997 = vmatprep.subr.mxu0 0.0
        %998 = vmatpush2.msra.mxu0 0.0
        %999 = vmatprep.subr.mxu0 0.0
        %1000 = vmatpush2.msra.mxu0 0.0
        %1001 = vmatprep.subr.mxu0 0.0
        %1002 = vmatpush2.msra.mxu0 0.0
        %1003 = vmatprep.subr.mxu0 0.0
        %1004 = vmatpush2.msra.mxu0 0.0
        %1005 = vmatprep.subr.mxu0 0.0
        %1006 = vmatpush2.msra.mxu0 0.0
        %1007 = vmatprep.subr.mxu0 0.0
        %1008 = vmatpush2.msra.mxu0 0.0
        %1009 = vmatprep.mubr.f32.mxu0 0.0
        %1010 = vmatmul.mubr.f32.gmra.mxu0 %v943
        %v1011 = vpop.f32.mrf.mxu0
        %v1012 = vadd.f32 0.0, %v1011
        %v1013 = vpop.f32.mrf.mxu0
        %1014 = vdwg.mxu0
        %v1016 = vsel %vm941, %v625, 0
        %1018 = vmatprep.subr.mxu0 0.0
        %1019 = vmatpush1.msra.mxu0 0.0
        %1020 = vmatprep.subr.mxu0 0.0
        %1021 = vmatpush1.msra.mxu0 0.0
        %1022 = vmatprep.subr.mxu0 0.0
        %1023 = vmatpush1.msra.mxu0 0.0
        %1024 = vmatprep.subr.mxu0 0.0
        %1025 = vmatpush1.msra.mxu0 0.0
        %1026 = vmatprep.subr.mxu0 0.0
        %1027 = vmatpush1.msra.mxu0 0.0
        %1028 = vmatprep.subr.mxu0 0.0
        %1029 = vmatpush1.msra.mxu0 0.0
        %1030 = vmatprep.subr.mxu0 0.0
        %1031 = vmatpush1.msra.mxu0 0.0
        %1032 = vmatprep.subr.mxu0 0.0
        %1033 = vmatpush1.msra.mxu0 0.0
        %1034 = vmatprep.subr.mxu0 0.0
        %1035 = vmatpush1.msra.mxu0 0.0
        %1036 = vmatprep.subr.mxu0 0.0
        %1037 = vmatpush1.msra.mxu0 0.0
        %1038 = vmatprep.subr.mxu0 0.0
        %1039 = vmatpush1.msra.mxu0 0.0
        %1040 = vmatprep.subr.mxu0 0.0
        %1041 = vmatpush1.msra.mxu0 0.0
        %1042 = vmatprep.subr.mxu0 0.0
        %1043 = vmatpush1.msra.mxu0 0.0
        %1044 = vmatprep.subr.mxu0 0.0
        %1045 = vmatpush1.msra.mxu0 0.0
        %1046 = vmatprep.subr.mxu0 0.0
        %1047 = vmatpush1.msra.mxu0 0.0
        %1048 = vmatprep.subr.mxu0 0.0
        %1049 = vmatpush1.msra.mxu0 %v1012
        %1050 = vmatprep.subr.mxu0 0.0
        %1051 = vmatpush2.msra.mxu0 0.0
        %1052 = vmatprep.subr.mxu0 0.0
        %1053 = vmatpush2.msra.mxu0 0.0
        %1054 = vmatprep.subr.mxu0 0.0
        %1055 = vmatpush2.msra.mxu0 0.0
        %1056 = vmatprep.subr.mxu0 0.0
        %1057 = vmatpush2.msra.mxu0 0.0
        %1058 = vmatprep.subr.mxu0 0.0
        %1059 = vmatpush2.msra.mxu0 0.0
        %1060 = vmatprep.subr.mxu0 0.0
        %1061 = vmatpush2.msra.mxu0 0.0
        %1062 = vmatprep.subr.mxu0 0.0
        %1063 = vmatpush2.msra.mxu0 0.0
        %1064 = vmatprep.subr.mxu0 0.0
        %1065 = vmatpush2.msra.mxu0 0.0
        %1066 = vmatprep.subr.mxu0 0.0
        %1067 = vmatpush2.msra.mxu0 0.0
        %1068 = vmatprep.subr.mxu0 0.0
        %1069 = vmatpush2.msra.mxu0 0.0
        %1070 = vmatprep.subr.mxu0 0.0
        %1071 = vmatpush2.msra.mxu0 0.0
        %1072 = vmatprep.subr.mxu0 0.0
        %1073 = vmatpush2.msra.mxu0 0.0
        %1074 = vmatprep.subr.mxu0 0.0
        %1075 = vmatpush2.msra.mxu0 0.0
        %1076 = vmatprep.subr.mxu0 0.0
        %1077 = vmatpush2.msra.mxu0 0.0
        %1078 = vmatprep.subr.mxu0 0.0
        %1079 = vmatpush2.msra.mxu0 0.0
        %1080 = vmatprep.subr.mxu0 0.0
        %1081 = vmatpush2.msra.mxu0 0.0
        %1082 = vmatprep.mubr.f32.mxu0 0.0
        %1083 = vmatmul.mubr.f32.gmra.mxu0 %v1016
        %v1084 = vpop.f32.mrf.mxu0
        %v1085 = vadd.f32 0.0, %v1084
        %v1086 = vpop.f32.mrf.mxu0
        %1087 = vdwg.mxu0
        %1089 = vset.pattern.permute.xlu0 0
        %1090 = vperm.xlu0 %1089, %v1085
        %v1091 = vpop.permute.xlu0 %1090
        %v1093 = vsub.f32 %v934, %v1091
        %v1094 = vsub.f32 %v935, %v1091
        %v1095 = vmul.f32 %v1093, %v1093
        %v1096 = vmul.f32 %v1094, %v1094
        %v1097 = vadd.f32 %v1095, %v1096
        %1098 = vadd.xlane.f32.xlu0 %v1097
        %v1099 = vpop.xlane.xlu0 %1098
        %1100 = vmatprep.subr.mxu0 0.0
        %1101 = vmatpush1.msra.mxu0 0.0
        %1102 = vmatprep.subr.mxu0 0.0
        %1103 = vmatpush1.msra.mxu0 0.0
        %1104 = vmatprep.subr.mxu0 0.0
        %1105 = vmatpush1.msra.mxu0 0.0
        %1106 = vmatprep.subr.mxu0 0.0
        %1107 = vmatpush1.msra.mxu0 0.0
        %1108 = vmatprep.subr.mxu0 0.0
        %1109 = vmatpush1.msra.mxu0 0.0
        %1110 = vmatprep.subr.mxu0 0.0
        %1111 = vmatpush1.msra.mxu0 0.0
        %1112 = vmatprep.subr.mxu0 0.0
        %1113 = vmatpush1.msra.mxu0 0.0
        %1114 = vmatprep.subr.mxu0 0.0
        %1115 = vmatpush1.msra.mxu0 0.0
        %1116 = vmatprep.subr.mxu0 0.0
        %1117 = vmatpush1.msra.mxu0 0.0
        %1118 = vmatprep.subr.mxu0 0.0
        %1119 = vmatpush1.msra.mxu0 0.0
        %1120 = vmatprep.subr.mxu0 0.0
        %1121 = vmatpush1.msra.mxu0 0.0
        %1122 = vmatprep.subr.mxu0 0.0
        %1123 = vmatpush1.msra.mxu0 0.0
        %1124 = vmatprep.subr.mxu0 0.0
        %1125 = vmatpush1.msra.mxu0 0.0
        %1126 = vmatprep.subr.mxu0 0.0
        %1127 = vmatpush1.msra.mxu0 0.0
        %1128 = vmatprep.subr.mxu0 0.0
        %1129 = vmatpush1.msra.mxu0 0.0
        %1130 = vmatprep.subr.mxu0 0.0
        %1131 = vmatpush1.msra.mxu0 %v1099
        %1132 = vmatprep.subr.mxu0 0.0
        %1133 = vmatpush2.msra.mxu0 0.0
        %1134 = vmatprep.subr.mxu0 0.0
        %1135 = vmatpush2.msra.mxu0 0.0
        %1136 = vmatprep.subr.mxu0 0.0
        %1137 = vmatpush2.msra.mxu0 0.0
        %1138 = vmatprep.subr.mxu0 0.0
        %1139 = vmatpush2.msra.mxu0 0.0
        %1140 = vmatprep.subr.mxu0 0.0
        %1141 = vmatpush2.msra.mxu0 0.0
        %1142 = vmatprep.subr.mxu0 0.0
        %1143 = vmatpush2.msra.mxu0 0.0
        %1144 = vmatprep.subr.mxu0 0.0
        %1145 = vmatpush2.msra.mxu0 0.0
        %1146 = vmatprep.subr.mxu0 0.0
        %1147 = vmatpush2.msra.mxu0 0.0
        %1148 = vmatprep.subr.mxu0 0.0
        %1149 = vmatpush2.msra.mxu0 0.0
        %1150 = vmatprep.subr.mxu0 0.0
        %1151 = vmatpush2.msra.mxu0 0.0
        %1152 = vmatprep.subr.mxu0 0.0
        %1153 = vmatpush2.msra.mxu0 0.0
        %1154 = vmatprep.subr.mxu0 0.0
        %1155 = vmatpush2.msra.mxu0 0.0
        %1156 = vmatprep.subr.mxu0 0.0
        %1157 = vmatpush2.msra.mxu0 0.0
        %1158 = vmatprep.subr.mxu0 0.0
        %1159 = vmatpush2.msra.mxu0 0.0
        %1160 = vmatprep.subr.mxu0 0.0
        %1161 = vmatpush2.msra.mxu0 0.0
        %1162 = vmatprep.subr.mxu0 0.0
        %1163 = vmatpush2.msra.mxu0 0.0
        %1164 = vmatprep.mubr.f32.mxu0 0.0
        %1165 = vmatmul.mubr.f32.gmra.mxu0 %v943
        %v1166 = vpop.f32.mrf.mxu0
        %v1167 = vadd.f32 0.0, %v1166
        %v1168 = vpop.f32.mrf.mxu0
        %1169 = vdwg.mxu0
        %1170 = vmatprep.subr.mxu0 0.0
        %1171 = vmatpush1.msra.mxu0 0.0
        %1172 = vmatprep.subr.mxu0 0.0
        %1173 = vmatpush1.msra.mxu0 0.0
        %1174 = vmatprep.subr.mxu0 0.0
        %1175 = vmatpush1.msra.mxu0 0.0
        %1176 = vmatprep.subr.mxu0 0.0
        %1177 = vmatpush1.msra.mxu0 0.0
        %1178 = vmatprep.subr.mxu0 0.0
        %1179 = vmatpush1.msra.mxu0 0.0
        %1180 = vmatprep.subr.mxu0 0.0
        %1181 = vmatpush1.msra.mxu0 0.0
        %1182 = vmatprep.subr.mxu0 0.0
        %1183 = vmatpush1.msra.mxu0 0.0
        %1184 = vmatprep.subr.mxu0 0.0
        %1185 = vmatpush1.msra.mxu0 0.0
        %1186 = vmatprep.subr.mxu0 0.0
        %1187 = vmatpush1.msra.mxu0 0.0
        %1188 = vmatprep.subr.mxu0 0.0
        %1189 = vmatpush1.msra.mxu0 0.0
        %1190 = vmatprep.subr.mxu0 0.0
        %1191 = vmatpush1.msra.mxu0 0.0
        %1192 = vmatprep.subr.mxu0 0.0
        %1193 = vmatpush1.msra.mxu0 0.0
        %1194 = vmatprep.subr.mxu0 0.0
        %1195 = vmatpush1.msra.mxu0 0.0
        %1196 = vmatprep.subr.mxu0 0.0
        %1197 = vmatpush1.msra.mxu0 0.0
        %1198 = vmatprep.subr.mxu0 0.0
        %1199 = vmatpush1.msra.mxu0 0.0
        %1200 = vmatprep.subr.mxu0 0.0
        %1201 = vmatpush1.msra.mxu0 %v1167
        %1202 = vmatprep.subr.mxu0 0.0
        %1203 = vmatpush2.msra.mxu0 0.0
        %1204 = vmatprep.subr.mxu0 0.0
        %1205 = vmatpush2.msra.mxu0 0.0
        %1206 = vmatprep.subr.mxu0 0.0
        %1207 = vmatpush2.msra.mxu0 0.0
        %1208 = vmatprep.subr.mxu0 0.0
        %1209 = vmatpush2.msra.mxu0 0.0
        %1210 = vmatprep.subr.mxu0 0.0
        %1211 = vmatpush2.msra.mxu0 0.0
        %1212 = vmatprep.subr.mxu0 0.0
        %1213 = vmatpush2.msra.mxu0 0.0
        %1214 = vmatprep.subr.mxu0 0.0
        %1215 = vmatpush2.msra.mxu0 0.0
        %1216 = vmatprep.subr.mxu0 0.0
        %1217 = vmatpush2.msra.mxu0 0.0
        %1218 = vmatprep.subr.mxu0 0.0
        %1219 = vmatpush2.msra.mxu0 0.0
        %1220 = vmatprep.subr.mxu0 0.0
        %1221 = vmatpush2.msra.mxu0 0.0
        %1222 = vmatprep.subr.mxu0 0.0
        %1223 = vmatpush2.msra.mxu0 0.0
        %1224 = vmatprep.subr.mxu0 0.0
        %1225 = vmatpush2.msra.mxu0 0.0
        %1226 = vmatprep.subr.mxu0 0.0
        %1227 = vmatpush2.msra.mxu0 0.0
        %1228 = vmatprep.subr.mxu0 0.0
        %1229 = vmatpush2.msra.mxu0 0.0
        %1230 = vmatprep.subr.mxu0 0.0
        %1231 = vmatpush2.msra.mxu0 0.0
        %1232 = vmatprep.subr.mxu0 0.0
        %1233 = vmatpush2.msra.mxu0 0.0
        %1234 = vmatprep.mubr.f32.mxu0 0.0
        %1235 = vmatmul.mubr.f32.gmra.mxu0 %v1016
        %v1236 = vpop.f32.mrf.mxu0
        %v1237 = vadd.f32 1e-05, %v1236
        %v1238 = vpop.f32.mrf.mxu0
        %1239 = vdwg.mxu0
        %v1240 = vrsqrt.pop %v1237
        %1242 = vset.pattern.permute.xlu0 0
        %1243 = vperm.xlu0 %1242, %v1240
        %v1244 = vpop.permute.xlu0 %1243
        %v1246 = vmul.f32 %v1093, %v1244
        %v1247 = vmul.f32 %v1094, %v1244
        %1249 = vset.pattern.permute.xlu0 0
        %1250 = vperm.xlu0 %1249, %v936
        %v1251 = vpop.permute.xlu0 %1250
        %v1253 = vmul.f32 %v1246, %v1251
        %v1254 = vmul.f32 %v1247, %v1251
        %1256 = vset.pattern.permute.xlu0 0
        %1257 = vperm.xlu0 %1256, %v937
        %v1258 = vpop.permute.xlu0 %1257
        %v1260 = vadd.f32 %v1253, %v1258
        %v1261 = vadd.f32 %v1254, %v1258
        %v1262 = vld [vmem:[%s620] sm:$0xff]
        %v1263 = vld [vmem:[%s620 + $0x8] sm:$0xff]
        %v1264 = vld [vmem:[%s620 + $0x10] sm:$0xff]
        %v1265 = vld [vmem:[%s620 + $0x18] sm:$0xff]
        %v1266 = vsub.f32 0.0, %v1262
        %v1267 = vsub.f32 0.0, %v1263
        %v1268 = vsub.f32 0.0, %v1264
        %v1269 = vsub.f32 0.0, %v1265
        %v1270 = vmul.f32 %v1266, 1.442695
        %v1271 = vpow.pop %v1270
        %v1272 = vmul.f32 %v1267, 1.442695
        %v1273 = vpow.pop %v1272
        %v1274 = vmul.f32 %v1268, 1.442695
        %v1275 = vpow.pop %v1274
        %v1276 = vmul.f32 %v1269, 1.442695
        %v1277 = vpow.pop %v1276
        %v1278 = vadd.f32 %v1271, 1.0
        %v1279 = vadd.f32 %v1273, 1.0
        %v1280 = vadd.f32 %v1275, 1.0
        %v1281 = vadd.f32 %v1277, 1.0
        %v1282 = vrcp.pop %v1278
        %v1283 = vmul.f32 %v1262, %v1282
        %v1284 = vrcp.pop %v1279
        %v1285 = vmul.f32 %v1263, %v1284
        %v1286 = vrcp.pop %v1280
        %v1287 = vmul.f32 %v1264, %v1286
        %v1288 = vrcp.pop %v1281
        %v1289 = vmul.f32 %v1265, %v1288
        %v1290 = vld [vmem:[%s13] sm:$0xff]
        %v1291 = vld [vmem:[%s14] sm:$0xff]
        %vm1292 = vcmask 261120
        %v1294 = vsel %vm1292, %v1290, 0
        %1296 = vmatprep.subr.mxu0 0.0
        %1297 = vmatpush1.msra.mxu0 0.0
        %1298 = vmatprep.subr.mxu0 0.0
        %1299 = vmatpush1.msra.mxu0 0.0
        %1300 = vmatprep.subr.mxu0 0.0
        %1301 = vmatpush1.msra.mxu0 0.0
        %1302 = vmatprep.subr.mxu0 0.0
        %1303 = vmatpush1.msra.mxu0 0.0
        %1304 = vmatprep.subr.mxu0 0.0
        %1305 = vmatpush1.msra.mxu0 0.0
        %1306 = vmatprep.subr.mxu0 0.0
        %1307 = vmatpush1.msra.mxu0 0.0
        %1308 = vmatprep.subr.mxu0 0.0
        %1309 = vmatpush1.msra.mxu0 0.0
        %1310 = vmatprep.subr.mxu0 0.0
        %1311 = vmatpush1.msra.mxu0 0.0
        %1312 = vmatprep.subr.mxu0 0.0
        %1313 = vmatpush1.msra.mxu0 0.0
        %1314 = vmatprep.subr.mxu0 0.0
        %1315 = vmatpush1.msra.mxu0 0.0
        %1316 = vmatprep.subr.mxu0 0.0
        %1317 = vmatpush1.msra.mxu0 0.0
        %1318 = vmatprep.subr.mxu0 0.0
        %1319 = vmatpush1.msra.mxu0 0.0
        %1320 = vmatprep.subr.mxu0 0.0
        %1321 = vmatpush1.msra.mxu0 %v1289
        %1322 = vmatprep.subr.mxu0 0.0
        %1323 = vmatpush1.msra.mxu0 %v1287
        %1324 = vmatprep.subr.mxu0 0.0
        %1325 = vmatpush1.msra.mxu0 %v1285
        %1326 = vmatprep.subr.mxu0 0.0
        %1327 = vmatpush1.msra.mxu0 %v1283
        %1328 = vmatprep.subr.mxu0 0.0
        %1329 = vmatpush2.msra.mxu0 0.0
        %1330 = vmatprep.subr.mxu0 0.0
        %1331 = vmatpush2.msra.mxu0 0.0
        %1332 = vmatprep.subr.mxu0 0.0
        %1333 = vmatpush2.msra.mxu0 0.0
        %1334 = vmatprep.subr.mxu0 0.0
        %1335 = vmatpush2.msra.mxu0 0.0
        %1336 = vmatprep.subr.mxu0 0.0
        %1337 = vmatpush2.msra.mxu0 0.0
        %1338 = vmatprep.subr.mxu0 0.0
        %1339 = vmatpush2.msra.mxu0 0.0
        %1340 = vmatprep.subr.mxu0 0.0
        %1341 = vmatpush2.msra.mxu0 0.0
        %1342 = vmatprep.subr.mxu0 0.0
        %1343 = vmatpush2.msra.mxu0 0.0
        %1344 = vmatprep.subr.mxu0 0.0
        %1345 = vmatpush2.msra.mxu0 0.0
        %1346 = vmatprep.subr.mxu0 0.0
        %1347 = vmatpush2.msra.mxu0 0.0
        %1348 = vmatprep.subr.mxu0 0.0
        %1349 = vmatpush2.msra.mxu0 0.0
        %1350 = vmatprep.subr.mxu0 0.0
        %1351 = vmatpush2.msra.mxu0 0.0
        %1352 = vmatprep.subr.mxu0 0.0
        %1353 = vmatpush2.msra.mxu0 0.0
        %1354 = vmatprep.subr.mxu0 0.0
        %1355 = vmatpush2.msra.mxu0 0.0
        %1356 = vmatprep.subr.mxu0 0.0
        %1357 = vmatpush2.msra.mxu0 0.0
        %1358 = vmatprep.subr.mxu0 0.0
        %1359 = vmatpush2.msra.mxu0 0.0
        %1360 = vmatprep.mubr.f32.mxu0 0.0
        %1361 = vmatmul.mubr.f32.gmra.mxu0 %v1294
        %v1362 = vpop.f32.mrf.mxu0
        %v1363 = vadd.f32 %v1291, %v1362
        %v1364 = vpop.f32.mrf.mxu0
        %1365 = vdwg.mxu0
        %v1366 = vld [vmem:[%s15] sm:$0xff]
        %v1367 = vld [vmem:[%s16] sm:$0xff]
        %v1369 = vsel %vm1292, %v1366, 0
        %1371 = vmatprep.subr.mxu0 0.0
        %1372 = vmatpush1.msra.mxu0 0.0
        %1373 = vmatprep.subr.mxu0 0.0
        %1374 = vmatpush1.msra.mxu0 0.0
        %1375 = vmatprep.subr.mxu0 0.0
        %1376 = vmatpush1.msra.mxu0 0.0
        %1377 = vmatprep.subr.mxu0 0.0
        %1378 = vmatpush1.msra.mxu0 0.0
        %1379 = vmatprep.subr.mxu0 0.0
        %1380 = vmatpush1.msra.mxu0 0.0
        %1381 = vmatprep.subr.mxu0 0.0
        %1382 = vmatpush1.msra.mxu0 0.0
        %1383 = vmatprep.subr.mxu0 0.0
        %1384 = vmatpush1.msra.mxu0 0.0
        %1385 = vmatprep.subr.mxu0 0.0
        %1386 = vmatpush1.msra.mxu0 0.0
        %1387 = vmatprep.subr.mxu0 0.0
        %1388 = vmatpush1.msra.mxu0 0.0
        %1389 = vmatprep.subr.mxu0 0.0
        %1390 = vmatpush1.msra.mxu0 0.0
        %1391 = vmatprep.subr.mxu0 0.0
        %1392 = vmatpush1.msra.mxu0 0.0
        %1393 = vmatprep.subr.mxu0 0.0
        %1394 = vmatpush1.msra.mxu0 0.0
        %1395 = vmatprep.subr.mxu0 0.0
        %1396 = vmatpush1.msra.mxu0 %v1289
        %1397 = vmatprep.subr.mxu0 0.0
        %1398 = vmatpush1.msra.mxu0 %v1287
        %1399 = vmatprep.subr.mxu0 0.0
        %1400 = vmatpush1.msra.mxu0 %v1285
        %1401 = vmatprep.subr.mxu0 0.0
        %1402 = vmatpush1.msra.mxu0 %v1283
        %1403 = vmatprep.subr.mxu0 0.0
        %1404 = vmatpush2.msra.mxu0 0.0
        %1405 = vmatprep.subr.mxu0 0.0
        %1406 = vmatpush2.msra.mxu0 0.0
        %1407 = vmatprep.subr.mxu0 0.0
        %1408 = vmatpush2.msra.mxu0 0.0
        %1409 = vmatprep.subr.mxu0 0.0
        %1410 = vmatpush2.msra.mxu0 0.0
        %1411 = vmatprep.subr.mxu0 0.0
        %1412 = vmatpush2.msra.mxu0 0.0
        %1413 = vmatprep.subr.mxu0 0.0
        %1414 = vmatpush2.msra.mxu0 0.0
        %1415 = vmatprep.subr.mxu0 0.0
        %1416 = vmatpush2.msra.mxu0 0.0
        %1417 = vmatprep.subr.mxu0 0.0
        %1418 = vmatpush2.msra.mxu0 0.0
        %1419 = vmatprep.subr.mxu0 0.0
        %1420 = vmatpush2.msra.mxu0 0.0
        %1421 = vmatprep.subr.mxu0 0.0
        %1422 = vmatpush2.msra.mxu0 0.0
        %1423 = vmatprep.subr.mxu0 0.0
        %1424 = vmatpush2.msra.mxu0 0.0
        %1425 = vmatprep.subr.mxu0 0.0
        %1426 = vmatpush2.msra.mxu0 0.0
        %1427 = vmatprep.subr.mxu0 0.0
        %1428 = vmatpush2.msra.mxu0 0.0
        %1429 = vmatprep.subr.mxu0 0.0
        %1430 = vmatpush2.msra.mxu0 0.0
        %1431 = vmatprep.subr.mxu0 0.0
        %1432 = vmatpush2.msra.mxu0 0.0
        %1433 = vmatprep.subr.mxu0 0.0
        %1434 = vmatpush2.msra.mxu0 0.0
        %1435 = vmatprep.mubr.f32.mxu0 0.0
        %1436 = vmatmul.mubr.f32.gmra.mxu0 %v1369
        %v1437 = vpop.f32.mrf.mxu0
        %v1438 = vadd.f32 %v1367, %v1437
        %v1439 = vpop.f32.mrf.mxu0
        %1440 = vdwg.mxu0
        %v1441 = vadd.f32 %v1363, 1.0
        %1443 = vset.pattern.permute.xlu0 0
        %1444 = vperm.xlu0 %1443, %v1441
        %v1445 = vpop.permute.xlu0 %1444
        %v1447 = vmul.f32 %v1260, %v1445
        %v1448 = vmul.f32 %v1261, %v1445
        %1450 = vset.pattern.permute.xlu0 0
        %1451 = vperm.xlu0 %1450, %v1438
        %v1452 = vpop.permute.xlu0 %1451
        %v1454 = vadd.f32 %v1447, %v1452
        %v1455 = vadd.f32 %v1448, %v1452
        %v1456 = vld [vmem:[%s8] sm:$0xff]
        %1457 = vrot.lane.b32.xlu0 %v1454, 1
        %v1458 = vpop.permute.xlu0 %1457
        %1459 = vrot.lane.b32.xlu0 %v1455, 1
        %v1460 = vpop.permute.xlu0 %1459
        %v1461 = vsel %vm636, %v1458, %v1460
        %v1462 = vsel %vm636, %v1460, %v1458
        %v1463 = vmul.f32 %v1462, %v653
        %v1464 = vmul.f32 %v1461, %v657
        %1465 = vrot.lane.b32.xlu0 %v1454, 127
        %v1466 = vpop.permute.xlu0 %1465
        %1467 = vrot.lane.b32.xlu0 %v1455, 127
        %v1468 = vpop.permute.xlu0 %1467
        %v1469 = vsel %vm664, %v1466, %v1468
        %v1470 = vsel %vm664, %v1468, %v1466
        %v1471 = vmul.f32 %v1469, %v680
        %v1472 = vmul.f32 %v1470, %v684
        %1473 = vrot.lane.b32.xlu0 %v1463, 16
        %v1474 = vpop.permute.xlu0 %1473
        %1475 = vrot.lane.b32.xlu0 %v1454, 16
        %v1476 = vpop.permute.xlu0 %1475
        %1477 = vrot.lane.b32.xlu0 %v1471, 16
        %v1478 = vpop.permute.xlu0 %1477
        %1479 = vrot.lane.b32.xlu0 %v1464, 16
        %v1480 = vpop.permute.xlu0 %1479
        %1481 = vrot.lane.b32.xlu0 %v1455, 16
        %v1482 = vpop.permute.xlu0 %1481
        %1483 = vrot.lane.b32.xlu0 %v1472, 16
        %v1484 = vpop.permute.xlu0 %1483
        %v1485 = vsel %vm700, %v1474, %v1480
        %v1486 = vsel %vm700, %v1476, %v1482
        %v1487 = vsel %vm700, %v1478, %v1484
        %v1488 = vsel %vm700, %v1480, %v1474
        %v1489 = vsel %vm700, %v1482, %v1476
        %v1490 = vsel %vm700, %v1484, %v1478
        %v1491 = vmul.f32 %v1488, %v718
        %v1492 = vmul.f32 %v1485, %v722
        %v1493 = vmul.f32 %v1489, %v718
        %v1494 = vmul.f32 %v1486, %v722
        %v1495 = vmul.f32 %v1490, %v718
        %v1496 = vmul.f32 %v1487, %v722
        %v1497 = vld [vmem:[%s7] sm:$0xf]
        %v1498 = vpack.c.bf16 %v1493, %v1491
        %v1499 = vpack.c.bf16 %v1494, %v1492
        %v1500 = vpack.c.bf16 %v1495, %v1495
        %v1501 = vpack.c.bf16 %v1496, %v1496
        %vm1502 = vcmask 195584
        %v1504 = vsel %vm1502, %v1497, 0
        %v1507 = vsel %vm689, %v1500, 0
        %v1510 = vsel %vm689, %v1501, 0
        %1512 = vmatprep.subr.bf16.mxu0 0
        %1513 = vmatpush1.bf16.msra.mxu0 0
        %1514 = vmatprep.subr.bf16.mxu0 0
        %1515 = vmatpush1.bf16.msra.mxu0 0
        %1516 = vmatprep.subr.bf16.mxu0 0
        %1517 = vmatpush1.bf16.msra.mxu0 0
        %1518 = vmatprep.subr.bf16.mxu0 0
        %1519 = vmatpush1.bf16.msra.mxu0 0
        %1520 = vmatprep.subr.bf16.mxu0 0
        %1521 = vmatpush1.bf16.msra.mxu0 0
        %1522 = vmatprep.subr.bf16.mxu0 0
        %1523 = vmatpush1.bf16.msra.mxu0 0
        %1524 = vmatprep.subr.bf16.mxu0 %v1510
        %1525 = vmatpush1.bf16.msra.mxu0 %v1507
        %1526 = vmatprep.subr.bf16.mxu0 %v1499
        %1527 = vmatpush1.bf16.msra.mxu0 %v1498
        %1528 = vmatprep.subr.bf16.mxu0 0
        %1529 = vmatpush2.bf16.msra.mxu0 0
        %1530 = vmatprep.subr.bf16.mxu0 0
        %1531 = vmatpush2.bf16.msra.mxu0 0
        %1532 = vmatprep.subr.bf16.mxu0 0
        %1533 = vmatpush2.bf16.msra.mxu0 0
        %1534 = vmatprep.subr.bf16.mxu0 0
        %1535 = vmatpush2.bf16.msra.mxu0 0
        %1536 = vmatprep.subr.bf16.mxu0 0
        %1537 = vmatpush2.bf16.msra.mxu0 0
        %1538 = vmatprep.subr.bf16.mxu0 0
        %1539 = vmatpush2.bf16.msra.mxu0 0
        %1540 = vmatprep.subr.bf16.mxu0 0
        %1541 = vmatpush2.bf16.msra.mxu0 0
        %1542 = vmatprep.subr.bf16.mxu0 0
        %1543 = vmatpush2.bf16.msra.mxu0 0
        %1544 = vmatprep.mubr.bf16.mxu0 0
        %1545 = vmatmul.mubr.bf16.gmra.mxu0 %v1504
        %v1546 = vpop.f32.mrf.mxu0
        %v1547 = vadd.f32 0.0, %v1546
        %v1548 = vpop.f32.mrf.mxu0
        %v1549 = vadd.f32 0.0, %v1548
        %v1550 = vpop.f32.mrf.mxu0
        %v1551 = vpop.f32.mrf.mxu0
        %1552 = vdwg.mxu0
        %1554 = vset.pattern.permute.xlu0 0
        %1555 = vperm.xlu0 %1554, %v1456
        %v1556 = vpop.permute.xlu0 %1555
        %v1558 = vadd.f32 %v1556, %v1547
        %v1559 = vadd.f32 %v1556, %v1549
        %s1560 = scalar_lea.vmem %s7, 4
        %v1561 = vld [vmem:[%s1560] sm:$0xf]
        %v1562 = vpack.c.bf16 %v1454, %v1463
        %v1563 = vpack.c.bf16 %v1455, %v1464
        %v1564 = vpack.c.bf16 %v1471, %v1471
        %v1565 = vpack.c.bf16 %v1472, %v1472
        %v1567 = vsel %vm1502, %v1561, 0
        %v1570 = vsel %vm689, %v1564, 0
        %v1573 = vsel %vm689, %v1565, 0
        %1575 = vmatprep.subr.bf16.mxu0 0
        %1576 = vmatpush1.bf16.msra.mxu0 0
        %1577 = vmatprep.subr.bf16.mxu0 0
        %1578 = vmatpush1.bf16.msra.mxu0 0
        %1579 = vmatprep.subr.bf16.mxu0 0
        %1580 = vmatpush1.bf16.msra.mxu0 0
        %1581 = vmatprep.subr.bf16.mxu0 0
        %1582 = vmatpush1.bf16.msra.mxu0 0
        %1583 = vmatprep.subr.bf16.mxu0 0
        %1584 = vmatpush1.bf16.msra.mxu0 0
        %1585 = vmatprep.subr.bf16.mxu0 0
        %1586 = vmatpush1.bf16.msra.mxu0 0
        %1587 = vmatprep.subr.bf16.mxu0 %v1573
        %1588 = vmatpush1.bf16.msra.mxu0 %v1570
        %1589 = vmatprep.subr.bf16.mxu0 %v1563
        %1590 = vmatpush1.bf16.msra.mxu0 %v1562
        %1591 = vmatprep.subr.bf16.mxu0 0
        %1592 = vmatpush2.bf16.msra.mxu0 0
        %1593 = vmatprep.subr.bf16.mxu0 0
        %1594 = vmatpush2.bf16.msra.mxu0 0
        %1595 = vmatprep.subr.bf16.mxu0 0
        %1596 = vmatpush2.bf16.msra.mxu0 0
        %1597 = vmatprep.subr.bf16.mxu0 0
        %1598 = vmatpush2.bf16.msra.mxu0 0
        %1599 = vmatprep.subr.bf16.mxu0 0
        %1600 = vmatpush2.bf16.msra.mxu0 0
        %1601 = vmatprep.subr.bf16.mxu0 0
        %1602 = vmatpush2.bf16.msra.mxu0 0
        %1603 = vmatprep.subr.bf16.mxu0 0
        %1604 = vmatpush2.bf16.msra.mxu0 0
        %1605 = vmatprep.subr.bf16.mxu0 0
        %1606 = vmatpush2.bf16.msra.mxu0 0
        %1607 = vmatprep.mubr.bf16.mxu0 0
        %1608 = vmatmul.mubr.bf16.gmra.mxu0 %v1567
        %v1609 = vpop.f32.mrf.mxu0
        %v1610 = vadd.f32 0.0, %v1609
        %v1611 = vpop.f32.mrf.mxu0
        %v1612 = vadd.f32 0.0, %v1611
        %v1613 = vpop.f32.mrf.mxu0
        %v1614 = vpop.f32.mrf.mxu0
        %1615 = vdwg.mxu0
        %v1616 = vadd.f32 %v1558, %v1610
        %v1617 = vadd.f32 %v1559, %v1612
        %1618 = vrot.lane.b32.xlu0 %v1463, 112
        %v1619 = vpop.permute.xlu0 %1618
        %1620 = vrot.lane.b32.xlu0 %v1454, 112
        %v1621 = vpop.permute.xlu0 %1620
        %1622 = vrot.lane.b32.xlu0 %v1471, 112
        %v1623 = vpop.permute.xlu0 %1622
        %1624 = vrot.lane.b32.xlu0 %v1464, 112
        %v1625 = vpop.permute.xlu0 %1624
        %1626 = vrot.lane.b32.xlu0 %v1455, 112
        %v1627 = vpop.permute.xlu0 %1626
        %1628 = vrot.lane.b32.xlu0 %v1472, 112
        %v1629 = vpop.permute.xlu0 %1628
        %v1630 = vsel %vm853, %v1619, %v1625
        %v1631 = vsel %vm853, %v1621, %v1627
        %v1632 = vsel %vm853, %v1623, %v1629
        %v1633 = vsel %vm853, %v1625, %v1619
        %v1634 = vsel %vm853, %v1627, %v1621
        %v1635 = vsel %vm853, %v1629, %v1623
        %v1636 = vmul.f32 %v1630, %v871
        %v1637 = vmul.f32 %v1633, %v875
        %v1638 = vmul.f32 %v1631, %v871
        %v1639 = vmul.f32 %v1634, %v875
        %v1640 = vmul.f32 %v1632, %v871
        %v1641 = vmul.f32 %v1635, %v875
        %s1642 = scalar_lea.vmem %s7, 8
        %v1643 = vld [vmem:[%s1642] sm:$0xf]
        %v1644 = vpack.c.bf16 %v1638, %v1636
        %v1645 = vpack.c.bf16 %v1639, %v1637
        %v1646 = vpack.c.bf16 %v1640, %v1640
        %v1647 = vpack.c.bf16 %v1641, %v1641
        %v1649 = vsel %vm1502, %v1643, 0
        %v1652 = vsel %vm689, %v1646, 0
        %v1655 = vsel %vm689, %v1647, 0
        %1657 = vmatprep.subr.bf16.mxu0 0
        %1658 = vmatpush1.bf16.msra.mxu0 0
        %1659 = vmatprep.subr.bf16.mxu0 0
        %1660 = vmatpush1.bf16.msra.mxu0 0
        %1661 = vmatprep.subr.bf16.mxu0 0
        %1662 = vmatpush1.bf16.msra.mxu0 0
        %1663 = vmatprep.subr.bf16.mxu0 0
        %1664 = vmatpush1.bf16.msra.mxu0 0
        %1665 = vmatprep.subr.bf16.mxu0 0
        %1666 = vmatpush1.bf16.msra.mxu0 0
        %1667 = vmatprep.subr.bf16.mxu0 0
        %1668 = vmatpush1.bf16.msra.mxu0 0
        %1669 = vmatprep.subr.bf16.mxu0 %v1655
        %1670 = vmatpush1.bf16.msra.mxu0 %v1652
        %1671 = vmatprep.subr.bf16.mxu0 %v1645
        %1672 = vmatpush1.bf16.msra.mxu0 %v1644
        %1673 = vmatprep.subr.bf16.mxu0 0
        %1674 = vmatpush2.bf16.msra.mxu0 0
        %1675 = vmatprep.subr.bf16.mxu0 0
        %1676 = vmatpush2.bf16.msra.mxu0 0
        %1677 = vmatprep.subr.bf16.mxu0 0
        %1678 = vmatpush2.bf16.msra.mxu0 0
        %1679 = vmatprep.subr.bf16.mxu0 0
        %1680 = vmatpush2.bf16.msra.mxu0 0
        %1681 = vmatprep.subr.bf16.mxu0 0
        %1682 = vmatpush2.bf16.msra.mxu0 0
        %1683 = vmatprep.subr.bf16.mxu0 0
        %1684 = vmatpush2.bf16.msra.mxu0 0
        %1685 = vmatprep.subr.bf16.mxu0 0
        %1686 = vmatpush2.bf16.msra.mxu0 0
        %1687 = vmatprep.subr.bf16.mxu0 0
        %1688 = vmatpush2.bf16.msra.mxu0 0
        %1689 = vmatprep.mubr.bf16.mxu0 0
        %1690 = vmatmul.mubr.bf16.gmra.mxu0 %v1649
        %v1691 = vpop.f32.mrf.mxu0
        %v1692 = vadd.f32 0.0, %v1691
        %v1693 = vpop.f32.mrf.mxu0
        %v1694 = vadd.f32 0.0, %v1693
        %v1695 = vpop.f32.mrf.mxu0
        %v1696 = vpop.f32.mrf.mxu0
        %1697 = vdwg.mxu0
        %v1698 = vadd.f32 %v1616, %v1692
        %v1699 = vadd.f32 %v1617, %v1694
        %v1700 = vld [vmem:[%s9] sm:$0xff]
        %v1701 = vld [vmem:[%s10] sm:$0xff]
        %v1702 = vadd.f32 %v1698, %v1699
        %1703 = vadd.xlane.f32.xlu0 %v1702
        %v1704 = vpop.xlane.xlu0 %1703
        %1705 = vmatprep.subr.mxu0 0.0
        %1706 = vmatpush1.msra.mxu0 0.0
        %1707 = vmatprep.subr.mxu0 0.0
        %1708 = vmatpush1.msra.mxu0 0.0
        %1709 = vmatprep.subr.mxu0 0.0
        %1710 = vmatpush1.msra.mxu0 0.0
        %1711 = vmatprep.subr.mxu0 0.0
        %1712 = vmatpush1.msra.mxu0 0.0
        %1713 = vmatprep.subr.mxu0 0.0
        %1714 = vmatpush1.msra.mxu0 0.0
        %1715 = vmatprep.subr.mxu0 0.0
        %1716 = vmatpush1.msra.mxu0 0.0
        %1717 = vmatprep.subr.mxu0 0.0
        %1718 = vmatpush1.msra.mxu0 0.0
        %1719 = vmatprep.subr.mxu0 0.0
        %1720 = vmatpush1.msra.mxu0 0.0
        %1721 = vmatprep.subr.mxu0 0.0
        %1722 = vmatpush1.msra.mxu0 0.0
        %1723 = vmatprep.subr.mxu0 0.0
        %1724 = vmatpush1.msra.mxu0 0.0
        %1725 = vmatprep.subr.mxu0 0.0
        %1726 = vmatpush1.msra.mxu0 0.0
        %1727 = vmatprep.subr.mxu0 0.0
        %1728 = vmatpush1.msra.mxu0 0.0
        %1729 = vmatprep.subr.mxu0 0.0
        %1730 = vmatpush1.msra.mxu0 0.0
        %1731 = vmatprep.subr.mxu0 0.0
        %1732 = vmatpush1.msra.mxu0 0.0
        %1733 = vmatprep.subr.mxu0 0.0
        %1734 = vmatpush1.msra.mxu0 0.0
        %1735 = vmatprep.subr.mxu0 0.0
        %1736 = vmatpush1.msra.mxu0 %v1704
        %1737 = vmatprep.subr.mxu0 0.0
        %1738 = vmatpush2.msra.mxu0 0.0
        %1739 = vmatprep.subr.mxu0 0.0
        %1740 = vmatpush2.msra.mxu0 0.0
        %1741 = vmatprep.subr.mxu0 0.0
        %1742 = vmatpush2.msra.mxu0 0.0
        %1743 = vmatprep.subr.mxu0 0.0
        %1744 = vmatpush2.msra.mxu0 0.0
        %1745 = vmatprep.subr.mxu0 0.0
        %1746 = vmatpush2.msra.mxu0 0.0
        %1747 = vmatprep.subr.mxu0 0.0
        %1748 = vmatpush2.msra.mxu0 0.0
        %1749 = vmatprep.subr.mxu0 0.0
        %1750 = vmatpush2.msra.mxu0 0.0
        %1751 = vmatprep.subr.mxu0 0.0
        %1752 = vmatpush2.msra.mxu0 0.0
        %1753 = vmatprep.subr.mxu0 0.0
        %1754 = vmatpush2.msra.mxu0 0.0
        %1755 = vmatprep.subr.mxu0 0.0
        %1756 = vmatpush2.msra.mxu0 0.0
        %1757 = vmatprep.subr.mxu0 0.0
        %1758 = vmatpush2.msra.mxu0 0.0
        %1759 = vmatprep.subr.mxu0 0.0
        %1760 = vmatpush2.msra.mxu0 0.0
        %1761 = vmatprep.subr.mxu0 0.0
        %1762 = vmatpush2.msra.mxu0 0.0
        %1763 = vmatprep.subr.mxu0 0.0
        %1764 = vmatpush2.msra.mxu0 0.0
        %1765 = vmatprep.subr.mxu0 0.0
        %1766 = vmatpush2.msra.mxu0 0.0
        %1767 = vmatprep.subr.mxu0 0.0
        %1768 = vmatpush2.msra.mxu0 0.0
        %1769 = vmatprep.mubr.f32.mxu0 0.0
        %1770 = vmatmul.mubr.f32.gmra.mxu0 %v943
        %v1771 = vpop.f32.mrf.mxu0
        %v1772 = vadd.f32 0.0, %v1771
        %v1773 = vpop.f32.mrf.mxu0
        %1774 = vdwg.mxu0
        %1775 = vmatprep.subr.mxu0 0.0
        %1776 = vmatpush1.msra.mxu0 0.0
        %1777 = vmatprep.subr.mxu0 0.0
        %1778 = vmatpush1.msra.mxu0 0.0
        %1779 = vmatprep.subr.mxu0 0.0
        %1780 = vmatpush1.msra.mxu0 0.0
        %1781 = vmatprep.subr.mxu0 0.0
        %1782 = vmatpush1.msra.mxu0 0.0
        %1783 = vmatprep.subr.mxu0 0.0
        %1784 = vmatpush1.msra.mxu0 0.0
        %1785 = vmatprep.subr.mxu0 0.0
        %1786 = vmatpush1.msra.mxu0 0.0
        %1787 = vmatprep.subr.mxu0 0.0
        %1788 = vmatpush1.msra.mxu0 0.0
        %1789 = vmatprep.subr.mxu0 0.0
        %1790 = vmatpush1.msra.mxu0 0.0
        %1791 = vmatprep.subr.mxu0 0.0
        %1792 = vmatpush1.msra.mxu0 0.0
        %1793 = vmatprep.subr.mxu0 0.0
        %1794 = vmatpush1.msra.mxu0 0.0
        %1795 = vmatprep.subr.mxu0 0.0
        %1796 = vmatpush1.msra.mxu0 0.0
        %1797 = vmatprep.subr.mxu0 0.0
        %1798 = vmatpush1.msra.mxu0 0.0
        %1799 = vmatprep.subr.mxu0 0.0
        %1800 = vmatpush1.msra.mxu0 0.0
        %1801 = vmatprep.subr.mxu0 0.0
        %1802 = vmatpush1.msra.mxu0 0.0
        %1803 = vmatprep.subr.mxu0 0.0
        %1804 = vmatpush1.msra.mxu0 0.0
        %1805 = vmatprep.subr.mxu0 0.0
        %1806 = vmatpush1.msra.mxu0 %v1772
        %1807 = vmatprep.subr.mxu0 0.0
        %1808 = vmatpush2.msra.mxu0 0.0
        %1809 = vmatprep.subr.mxu0 0.0
        %1810 = vmatpush2.msra.mxu0 0.0
        %1811 = vmatprep.subr.mxu0 0.0
        %1812 = vmatpush2.msra.mxu0 0.0
        %1813 = vmatprep.subr.mxu0 0.0
        %1814 = vmatpush2.msra.mxu0 0.0
        %1815 = vmatprep.subr.mxu0 0.0
        %1816 = vmatpush2.msra.mxu0 0.0
        %1817 = vmatprep.subr.mxu0 0.0
        %1818 = vmatpush2.msra.mxu0 0.0
        %1819 = vmatprep.subr.mxu0 0.0
        %1820 = vmatpush2.msra.mxu0 0.0
        %1821 = vmatprep.subr.mxu0 0.0
        %1822 = vmatpush2.msra.mxu0 0.0
        %1823 = vmatprep.subr.mxu0 0.0
        %1824 = vmatpush2.msra.mxu0 0.0
        %1825 = vmatprep.subr.mxu0 0.0
        %1826 = vmatpush2.msra.mxu0 0.0
        %1827 = vmatprep.subr.mxu0 0.0
        %1828 = vmatpush2.msra.mxu0 0.0
        %1829 = vmatprep.subr.mxu0 0.0
        %1830 = vmatpush2.msra.mxu0 0.0
        %1831 = vmatprep.subr.mxu0 0.0
        %1832 = vmatpush2.msra.mxu0 0.0
        %1833 = vmatprep.subr.mxu0 0.0
        %1834 = vmatpush2.msra.mxu0 0.0
        %1835 = vmatprep.subr.mxu0 0.0
        %1836 = vmatpush2.msra.mxu0 0.0
        %1837 = vmatprep.subr.mxu0 0.0
        %1838 = vmatpush2.msra.mxu0 0.0
        %1839 = vmatprep.mubr.f32.mxu0 0.0
        %1840 = vmatmul.mubr.f32.gmra.mxu0 %v1016
        %v1841 = vpop.f32.mrf.mxu0
        %v1842 = vadd.f32 0.0, %v1841
        %v1843 = vpop.f32.mrf.mxu0
        %1844 = vdwg.mxu0
        %1846 = vset.pattern.permute.xlu0 0
        %1847 = vperm.xlu0 %1846, %v1842
        %v1848 = vpop.permute.xlu0 %1847
        %v1850 = vsub.f32 %v1698, %v1848
        %v1851 = vsub.f32 %v1699, %v1848
        %v1852 = vmul.f32 %v1850, %v1850
        %v1853 = vmul.f32 %v1851, %v1851
        %v1854 = vadd.f32 %v1852, %v1853
        %1855 = vadd.xlane.f32.xlu0 %v1854
        %v1856 = vpop.xlane.xlu0 %1855
        %1857 = vmatprep.subr.mxu0 0.0
        %1858 = vmatpush1.msra.mxu0 0.0
        %1859 = vmatprep.subr.mxu0 0.0
        %1860 = vmatpush1.msra.mxu0 0.0
        %1861 = vmatprep.subr.mxu0 0.0
        %1862 = vmatpush1.msra.mxu0 0.0
        %1863 = vmatprep.subr.mxu0 0.0
        %1864 = vmatpush1.msra.mxu0 0.0
        %1865 = vmatprep.subr.mxu0 0.0
        %1866 = vmatpush1.msra.mxu0 0.0
        %1867 = vmatprep.subr.mxu0 0.0
        %1868 = vmatpush1.msra.mxu0 0.0
        %1869 = vmatprep.subr.mxu0 0.0
        %1870 = vmatpush1.msra.mxu0 0.0
        %1871 = vmatprep.subr.mxu0 0.0
        %1872 = vmatpush1.msra.mxu0 0.0
        %1873 = vmatprep.subr.mxu0 0.0
        %1874 = vmatpush1.msra.mxu0 0.0
        %1875 = vmatprep.subr.mxu0 0.0
        %1876 = vmatpush1.msra.mxu0 0.0
        %1877 = vmatprep.subr.mxu0 0.0
        %1878 = vmatpush1.msra.mxu0 0.0
        %1879 = vmatprep.subr.mxu0 0.0
        %1880 = vmatpush1.msra.mxu0 0.0
        %1881 = vmatprep.subr.mxu0 0.0
        %1882 = vmatpush1.msra.mxu0 0.0
        %1883 = vmatprep.subr.mxu0 0.0
        %1884 = vmatpush1.msra.mxu0 0.0
        %1885 = vmatprep.subr.mxu0 0.0
        %1886 = vmatpush1.msra.mxu0 0.0
        %1887 = vmatprep.subr.mxu0 0.0
        %1888 = vmatpush1.msra.mxu0 %v1856
        %1889 = vmatprep.subr.mxu0 0.0
        %1890 = vmatpush2.msra.mxu0 0.0
        %1891 = vmatprep.subr.mxu0 0.0
        %1892 = vmatpush2.msra.mxu0 0.0
        %1893 = vmatprep.subr.mxu0 0.0
        %1894 = vmatpush2.msra.mxu0 0.0
        %1895 = vmatprep.subr.mxu0 0.0
        %1896 = vmatpush2.msra.mxu0 0.0
        %1897 = vmatprep.subr.mxu0 0.0
        %1898 = vmatpush2.msra.mxu0 0.0
        %1899 = vmatprep.subr.mxu0 0.0
        %1900 = vmatpush2.msra.mxu0 0.0
        %1901 = vmatprep.subr.mxu0 0.0
        %1902 = vmatpush2.msra.mxu0 0.0
        %1903 = vmatprep.subr.mxu0 0.0
        %1904 = vmatpush2.msra.mxu0 0.0
        %1905 = vmatprep.subr.mxu0 0.0
        %1906 = vmatpush2.msra.mxu0 0.0
        %1907 = vmatprep.subr.mxu0 0.0
        %1908 = vmatpush2.msra.mxu0 0.0
        %1909 = vmatprep.subr.mxu0 0.0
        %1910 = vmatpush2.msra.mxu0 0.0
        %1911 = vmatprep.subr.mxu0 0.0
        %1912 = vmatpush2.msra.mxu0 0.0
        %1913 = vmatprep.subr.mxu0 0.0
        %1914 = vmatpush2.msra.mxu0 0.0
        %1915 = vmatprep.subr.mxu0 0.0
        %1916 = vmatpush2.msra.mxu0 0.0
        %1917 = vmatprep.subr.mxu0 0.0
        %1918 = vmatpush2.msra.mxu0 0.0
        %1919 = vmatprep.subr.mxu0 0.0
        %1920 = vmatpush2.msra.mxu0 0.0
        %1921 = vmatprep.mubr.f32.mxu0 0.0
        %1922 = vmatmul.mubr.f32.gmra.mxu0 %v943
        %v1923 = vpop.f32.mrf.mxu0
        %v1924 = vadd.f32 0.0, %v1923
        %v1925 = vpop.f32.mrf.mxu0
        %1926 = vdwg.mxu0
        %1927 = vmatprep.subr.mxu0 0.0
        %1928 = vmatpush1.msra.mxu0 0.0
        %1929 = vmatprep.subr.mxu0 0.0
        %1930 = vmatpush1.msra.mxu0 0.0
        %1931 = vmatprep.subr.mxu0 0.0
        %1932 = vmatpush1.msra.mxu0 0.0
        %1933 = vmatprep.subr.mxu0 0.0
        %1934 = vmatpush1.msra.mxu0 0.0
        %1935 = vmatprep.subr.mxu0 0.0
        %1936 = vmatpush1.msra.mxu0 0.0
        %1937 = vmatprep.subr.mxu0 0.0
        %1938 = vmatpush1.msra.mxu0 0.0
        %1939 = vmatprep.subr.mxu0 0.0
        %1940 = vmatpush1.msra.mxu0 0.0
        %1941 = vmatprep.subr.mxu0 0.0
        %1942 = vmatpush1.msra.mxu0 0.0
        %1943 = vmatprep.subr.mxu0 0.0
        %1944 = vmatpush1.msra.mxu0 0.0
        %1945 = vmatprep.subr.mxu0 0.0
        %1946 = vmatpush1.msra.mxu0 0.0
        %1947 = vmatprep.subr.mxu0 0.0
        %1948 = vmatpush1.msra.mxu0 0.0
        %1949 = vmatprep.subr.mxu0 0.0
        %1950 = vmatpush1.msra.mxu0 0.0
        %1951 = vmatprep.subr.mxu0 0.0
        %1952 = vmatpush1.msra.mxu0 0.0
        %1953 = vmatprep.subr.mxu0 0.0
        %1954 = vmatpush1.msra.mxu0 0.0
        %1955 = vmatprep.subr.mxu0 0.0
        %1956 = vmatpush1.msra.mxu0 0.0
        %1957 = vmatprep.subr.mxu0 0.0
        %1958 = vmatpush1.msra.mxu0 %v1924
        %1959 = vmatprep.subr.mxu0 0.0
        %1960 = vmatpush2.msra.mxu0 0.0
        %1961 = vmatprep.subr.mxu0 0.0
        %1962 = vmatpush2.msra.mxu0 0.0
        %1963 = vmatprep.subr.mxu0 0.0
        %1964 = vmatpush2.msra.mxu0 0.0
        %1965 = vmatprep.subr.mxu0 0.0
        %1966 = vmatpush2.msra.mxu0 0.0
        %1967 = vmatprep.subr.mxu0 0.0
        %1968 = vmatpush2.msra.mxu0 0.0
        %1969 = vmatprep.subr.mxu0 0.0
        %1970 = vmatpush2.msra.mxu0 0.0
        %1971 = vmatprep.subr.mxu0 0.0
        %1972 = vmatpush2.msra.mxu0 0.0
        %1973 = vmatprep.subr.mxu0 0.0
        %1974 = vmatpush2.msra.mxu0 0.0
        %1975 = vmatprep.subr.mxu0 0.0
        %1976 = vmatpush2.msra.mxu0 0.0
        %1977 = vmatprep.subr.mxu0 0.0
        %1978 = vmatpush2.msra.mxu0 0.0
        %1979 = vmatprep.subr.mxu0 0.0
        %1980 = vmatpush2.msra.mxu0 0.0
        %1981 = vmatprep.subr.mxu0 0.0
        %1982 = vmatpush2.msra.mxu0 0.0
        %1983 = vmatprep.subr.mxu0 0.0
        %1984 = vmatpush2.msra.mxu0 0.0
        %1985 = vmatprep.subr.mxu0 0.0
        %1986 = vmatpush2.msra.mxu0 0.0
        %1987 = vmatprep.subr.mxu0 0.0
        %1988 = vmatpush2.msra.mxu0 0.0
        %1989 = vmatprep.subr.mxu0 0.0
        %1990 = vmatpush2.msra.mxu0 0.0
        %1991 = vmatprep.mubr.f32.mxu0 0.0
        %1992 = vmatmul.mubr.f32.gmra.mxu0 %v1016
        %v1993 = vpop.f32.mrf.mxu0
        %v1994 = vadd.f32 1e-05, %v1993
        %v1995 = vpop.f32.mrf.mxu0
        %1996 = vdwg.mxu0
        %v1997 = vrsqrt.pop %v1994
        %1999 = vset.pattern.permute.xlu0 0
        %2000 = vperm.xlu0 %1999, %v1997
        %v2001 = vpop.permute.xlu0 %2000
        %v2003 = vmul.f32 %v1850, %v2001
        %v2004 = vmul.f32 %v1851, %v2001
        %2006 = vset.pattern.permute.xlu0 0
        %2007 = vperm.xlu0 %2006, %v1700
        %v2008 = vpop.permute.xlu0 %2007
        %v2010 = vmul.f32 %v2003, %v2008
        %v2011 = vmul.f32 %v2004, %v2008
        %2013 = vset.pattern.permute.xlu0 0
        %2014 = vperm.xlu0 %2013, %v1701
        %v2015 = vpop.permute.xlu0 %2014
        %v2017 = vadd.f32 %v2010, %v2015
        %v2018 = vadd.f32 %v2011, %v2015
        %v2019 = vsub.f32 0.0, %v2017
        %v2020 = vsub.f32 0.0, %v2018
        %v2021 = vmul.f32 %v2019, 1.442695
        %v2022 = vpow.pop %v2021
        %v2023 = vmul.f32 %v2020, 1.442695
        %v2024 = vpow.pop %v2023
        %v2025 = vadd.f32 %v2022, 1.0
        %v2026 = vadd.f32 %v2024, 1.0
        %v2027 = vrcp.pop %v2025
        %v2028 = vmul.f32 %v2017, %v2027
        %v2029 = vrcp.pop %v2026
        %v2030 = vmul.f32 %v2018, %v2029
        %v2031 = vld [vmem:[%s11] sm:$0xf]
        %v2032 = vpack.c.bf16 %v622, %v622
        %v2033 = vpack.c.bf16 %v628, %v628
        %v2034 = vld [vmem:[%s12] sm:$0xff]
        %2036 = vset.pattern.permute.xlu0 0
        %2037 = vperm.xlu0 %2036, %v2034
        %v2038 = vpop.permute.xlu0 %2037
        %vm2040 = vcmask 31744
        %v2042 = vsel %vm2040, %v2031, 0
        %vm2044 = vcmask 1041408
        %v2046 = vsel %vm2044, %v2032, 0
        %v2049 = vsel %vm2044, %v2033, 0
        %2051 = vmatprep.subr.bf16.mxu0 0
        %2052 = vmatpush1.bf16.msra.mxu0 0
        %2053 = vmatprep.subr.bf16.mxu0 0
        %2054 = vmatpush1.bf16.msra.mxu0 0
        %2055 = vmatprep.subr.bf16.mxu0 0
        %2056 = vmatpush1.bf16.msra.mxu0 0
        %2057 = vmatprep.subr.bf16.mxu0 0
        %2058 = vmatpush1.bf16.msra.mxu0 0
        %2059 = vmatprep.subr.bf16.mxu0 0
        %2060 = vmatpush1.bf16.msra.mxu0 0
        %2061 = vmatprep.subr.bf16.mxu0 0
        %2062 = vmatpush1.bf16.msra.mxu0 0
        %2063 = vmatprep.subr.bf16.mxu0 0
        %2064 = vmatpush1.bf16.msra.mxu0 0
        %2065 = vmatprep.subr.bf16.mxu0 %v2049
        %2066 = vmatpush1.bf16.msra.mxu0 %v2046
        %2067 = vmatprep.subr.bf16.mxu0 0
        %2068 = vmatpush2.bf16.msra.mxu0 0
        %2069 = vmatprep.subr.bf16.mxu0 0
        %2070 = vmatpush2.bf16.msra.mxu0 0
        %2071 = vmatprep.subr.bf16.mxu0 0
        %2072 = vmatpush2.bf16.msra.mxu0 0
        %2073 = vmatprep.subr.bf16.mxu0 0
        %2074 = vmatpush2.bf16.msra.mxu0 0
        %2075 = vmatprep.subr.bf16.mxu0 0
        %2076 = vmatpush2.bf16.msra.mxu0 0
        %2077 = vmatprep.subr.bf16.mxu0 0
        %2078 = vmatpush2.bf16.msra.mxu0 0
        %2079 = vmatprep.subr.bf16.mxu0 0
        %2080 = vmatpush2.bf16.msra.mxu0 0
        %2081 = vmatprep.subr.bf16.mxu0 0
        %2082 = vmatpush2.bf16.msra.mxu0 0
        %2083 = vmatprep.mubr.bf16.mxu0 0
        %2084 = vmatmul.mubr.bf16.gmra.mxu0 %v2042
        %v2085 = vpop.f32.mrf.mxu0
        %v2086 = vadd.f32 %v2038, %v2085
        %v2087 = vpop.f32.mrf.mxu0
        %v2088 = vadd.f32 %v2038, %v2087
        %v2089 = vpop.f32.mrf.mxu0
        %v2090 = vpop.f32.mrf.mxu0
        %2091 = vdwg.mxu0
        %v2092 = vadd.f32 %v2028, %v2086
        %v2093 = vadd.f32 %v2030, %v2088
        %2094 = vst [vmem:[%s610] sm:$0xff] %v2092
        %2095 = vst [vmem:[%s610 + $0x8] sm:$0xff] %v2093
        %s2096 = sand.u32 %s450, 1
        %s2097 = scalar_lea.sflag [#allocation3], %s2096
        %s2098 = sand.u32 %s450, 1
        %s2099 = smul.addr %s2098, 16
        %s2100 = scalar_lea.vmem [#allocation2], %s2099
        // Predicated region
        $region97: #{tpu_custom_call.1} parent=95 // pred_check
          %p2101 = pneg %p460
        $region98: #{tpu_custom_call.1} parent=95 // pred_check_branch
          %2103 = sbr.rel (%p2101) target = $region100
        $region99: #{tpu_custom_call.1} parent=95 // pred_region
          %s2105 = ssub.s32 256, 256
          %2106 = vsyncadd %s2097, %s2105
          %s2107 = smul.addr %s33, 2
          %s2108 = smul.addr %s2107, 128
          %s2109 = scalar_lea.hbm %s19, %s2108
          %s2111 = sshll.u32 %s2100, 4
          %s2112 = int_to_ptr.vmem [resolvable:$true] %s2111
          %2114 = dma.vmem_to_hbm [thread:$0]  %s2112, 256, %s2109, %s2097
        $region100: #{tpu_custom_call.1} parent=95 // pred_fallthru
          _
      $region96: #{tpu_custom_call.1} parent=5 // pred_fallthru
        _
      %p2115 = scmp.le.s32.totalorder 2, %s28
      // Predicated region
      $region101: #{tpu_custom_call.1} parent=5 // pred_check
        %p2116 = pneg %p2115
      $region102: #{tpu_custom_call.1} parent=5 // pred_check_branch
        %2118 = sbr.rel (%p2116) target = $region104
      $region103: #{tpu_custom_call.1} parent=5 // pred_region
        %s2119 = ssub.s32 %s28, 2
        // Predicated region
        $region105: #{tpu_custom_call.1} parent=103 // pred_check
          %p2120 = pneg %p466
        $region106: #{tpu_custom_call.1} parent=103 // pred_check_branch
          %2122 = sbr.rel (%p2120) target = $region108
        $region107: #{tpu_custom_call.1} parent=103 // pred_region
          %s2123 = sand.u32 %s451, 1
          %s2124 = scalar_lea.sflag [#allocation3], %s2123
          %s2125 = sand.u32 %s451, 1
          %s2126 = smul.addr %s2125, 16
          %s2127 = scalar_lea.vmem [#allocation2], %s2126
          %2128 = dma.done %s2124, 256
        $region108: #{tpu_custom_call.1} parent=103 // pred_fallthru
          _
      $region104: #{tpu_custom_call.1} parent=5 // pred_fallthru
        _
    $region6: #{tpu_custom_call.1} parent=1 // loop_footer
      %s32 = sadd.s32 1, %s28
    $region7: #{tpu_custom_call.1} parent=1 // loop_footer_branch
      %27 = sbr.rel target = $region3
    $region8: #{tpu_custom_call.1} parent=1 // loop_exit
      _
    %2129 = vsyncpa [#allocation3], 1
    %s2130 = scalar_lea.sflag [#allocation3], 1
    %2131 = vsyncpa %s2130, 1

</llo_original>
